<compile_context>
chip_gen: v7x
topology: tpu7x:2x2x1
jax: 0.10.0
libtpu: 0.0.40
codegen_flags: <defaults>
</compile_context>

<pallas_src>
import functools
import math

import jax
import jax.numpy as jnp
from jax.experimental import pallas as pl
from jax.experimental.pallas import tpu as pltpu


# ------------------------------ model config --------------------------------

class Config:
    vocab_size = 100
    hidden = 32
    num_layers = 2
    num_heads = 4
    head_dim = 8              # hidden // num_heads
    intermediate = 64
    max_position = 16
    type_vocab = 2
    num_labels = 3
    logits_pad = 128          # lane-dense padded classifier width
    ln_eps = 1e-12


# ------------------------------ fused kernel --------------------------------

def _layernorm(x, gamma, beta, eps):
    # f32 LayerNorm over the last dim (VPU math stays f32 on all chips).
    mean = jnp.mean(x, axis=-1, keepdims=True)
    var = jnp.mean(jnp.square(x - mean), axis=-1, keepdims=True)
    return (x - mean) * jax.lax.rsqrt(var + eps) * gamma + beta


def _bert_fused_kernel(
    # inputs
    emb_ref, mask_ref, emb_ln_ref,
    wqkv_ref, bqkv_ref, wo_ref, wi_ref, bi_ref, wo2_ref, lnv_ref,
    pool_w_ref, pool_b_ref, cls_w_ref, cls_b_ref,
    # outputs
    logits_ref,
    # scratch
    h_ref,
    *, B, S, H, nh, dh, eps):
    layer = pl.program_id(0)
    scale = 1.0 / math.sqrt(dh)
    inv_sqrt2 = 1.0 / math.sqrt(2.0)
    BS = B * S

    # ---- embedding LayerNorm on the first grid step only
    # TODO(synk): at real BERT shapes keep `emb` out of VMEM residency
    # (memory_space=pl.ANY + one-shot make_async_copy into h_ref on layer 0)
    # instead of a fixed BlockSpec resident across all layers.
    @pl.when(layer == 0)
    def _():
        x = emb_ref[...].astype(jnp.float32)
        h_ref[...] = _layernorm(x, emb_ln_ref[0:1, :], emb_ln_ref[1:2, :], eps)

    h = h_ref[...]                                      # (BS, H) f32 carry

    # ---- fused QKV projection: one [H, 3H] MXU matmul (bf16 in, f32 acc),
    #      kept as a bf16 VALUE (no f32 scratch buffer).
    qkv = (jnp.dot(h.astype(jnp.bfloat16), wqkv_ref[...],
                   preferred_element_type=jnp.float32) + bqkv_ref[...])
    qkv = qkv.astype(jnp.bfloat16)                      # (BS, 3H) bf16

    # ---- additive mask broadcast hoisted out of the head loop (once/layer)
    mask_b = mask_ref[...][:, None, :]                  # (B, 1, S) f32

    # ---- attention: per-head score/PV einsums (static unroll), bf16 MXU
    #      operands, f32 softmax stats; per-head contexts merged with a single
    #      lane-dim concatenate (one full-width value, no masked stores).
    # TODO(synk): at real shapes (S=512) replace the materialized SxS scores
    # with a flash-style KV-tiled online softmax.
    ctx_heads = []
    for hd in range(nh):
        q = qkv[:, hd * dh:(hd + 1) * dh].reshape(B, S, dh)
        k = qkv[:, H + hd * dh:H + (hd + 1) * dh].reshape(B, S, dh)
        v = qkv[:, 2 * H + hd * dh:2 * H + (hd + 1) * dh].reshape(B, S, dh)
        s = jnp.einsum("bqd,bkd->bqk", q, k,
                       preferred_element_type=jnp.float32) * scale
        s = s + mask_b                                  # broadcast over queries
        s = s - jnp.max(s, axis=-1, keepdims=True)
        p = jnp.exp(s)
        # EUP approx reciprocal (free slot); not bit-exact vs a torch softmax.
        p = p * pl.reciprocal(jnp.sum(p, axis=-1, keepdims=True), approx=True)
        ctx = jnp.einsum("bqk,bkd->bqd", p.astype(jnp.bfloat16), v,
                         preferred_element_type=jnp.float32)
        ctx_heads.append(ctx.reshape(BS, dh))
    ctx_all = jnp.concatenate(ctx_heads, axis=-1).astype(jnp.bfloat16)  # (BS, H)

    # ---- per-layer packed vectors: [bo, ln1_g, ln1_b, bo2, ln2_g, ln2_b]
    lnv = lnv_ref[...]                                  # (6, H) f32
    bo, ln1_g, ln1_b = lnv[0:1], lnv[1:2], lnv[2:3]
    bo2, ln2_g, ln2_b = lnv[3:4], lnv[4:5], lnv[5:6]

    # ---- attention output projection + residual + LayerNorm
    attn_out = jnp.dot(ctx_all, wo_ref[...],
                       preferred_element_type=jnp.float32) + bo
    h1 = _layernorm(attn_out + h, ln1_g, ln1_b, eps)

    # ---- FFN (exact erf GELU, as in BERT) + residual + LayerNorm
    ffn = jnp.dot(h1.astype(jnp.bfloat16), wi_ref[...],
                  preferred_element_type=jnp.float32) + bi_ref[...]
    ffn = 0.5 * ffn * (1.0 + jax.lax.erf(ffn * inv_sqrt2))
    ffn_out = jnp.dot(ffn.astype(jnp.bfloat16), wo2_ref[...],
                      preferred_element_type=jnp.float32) + bo2
    h2 = _layernorm(ffn_out + h1, ln2_g, ln2_b, eps)
    h_ref[...] = h2                                     # carry to next layer

    # ---- pooler (tanh on CLS) + classifier, last grid step only.
    #      Output block is lane-dense (B, 128); columns >= num_labels are 0.
    @pl.when(layer == pl.num_programs(0) - 1)
    def _():
        # CLS rows 0, S, 2S, ... — assumes the (B*S, H) batch-major reshape
        # done in the wrapper.
        cls_tok = h_ref[pl.ds(0, B, stride=S), :]
        pooled = jnp.tanh(
            jnp.dot(cls_tok.astype(jnp.bfloat16), pool_w_ref[...],
                    preferred_element_type=jnp.float32) + pool_b_ref[...])
        logits = jnp.dot(pooled.astype(jnp.bfloat16), cls_w_ref[...],
                         preferred_element_type=jnp.float32) + cls_b_ref[...]
        logits_ref[...] = logits.astype(logits_ref.dtype)


# ----------------------------- kernel wrapper --------------------------------

def bert_encoder_pallas(emb2d, mask_add, p, cfg):
    B, S = mask_add.shape
    H, nh, dh = cfg.hidden, cfg.num_heads, cfg.head_dim
    I, L = cfg.intermediate, cfg.num_layers
    NLP = cfg.logits_pad
    BS = B * S

    kernel = functools.partial(_bert_fused_kernel, B=B, S=S, H=H, nh=nh, dh=dh,
                               eps=cfg.ln_eps)

    def fixed(*block):         # operands resident across all layers (DMA'd once)
        n = len(block)
        return pl.BlockSpec(block, lambda l, _n=n: (0,) * _n)

    def per_layer(*block):     # operands streamed per layer (leading L axis,
        n = len(block)         # squeezed so the kernel sees a clean 2-D ref)
        return pl.BlockSpec((pl.Squeezed(),) + block,
                            lambda l, _n=n: (l,) + (0,) * _n)

    # TODO(synk): for real BERT shapes (S=512, H=768, B>=8) add a leading
    # "parallel" row-tile axis over B (megacore), flash-style KV tiling, and
    # CompilerParams(vmem_limit_bytes=...); at this toy size everything fits
    # in VMEM trivially and the grid is latency/overhead dominated.
    grid_spec = pltpu.PrefetchScalarGridSpec(
        num_scalar_prefetch=0,
        grid=(L,),
        in_specs=[
            fixed(BS, H),              # embeddings
            fixed(B, S),               # additive attention mask
            fixed(2, H),               # embedding LN [gamma; beta]
            per_layer(H, 3 * H),       # fused QKV weight
            per_layer(1, 3 * H),       # fused QKV bias
            per_layer(H, H),           # attention output weight
            per_layer(H, I),           # FFN up weight
            per_layer(1, I),           # FFN up bias
            per_layer(I, H),           # FFN down weight
            per_layer(6, H),           # packed [bo, ln1_g, ln1_b, bo2, ln2_g, ln2_b]
            fixed(H, H),               # pooler weight
            fixed(1, H),               # pooler bias
            fixed(H, NLP),             # classifier weight (lane-padded to 128)
            fixed(1, NLP),             # classifier bias   (lane-padded to 128)
        ],
        out_specs=pl.BlockSpec((B, NLP), lambda l: (0, 0)),
        scratch_shapes=[
            pltpu.VMEM((BS, H), jnp.float32),   # hidden-state carry (f32)
        ],
    )

    logits_padded = pl.pallas_call(
        kernel,
        out_shape=jax.ShapeDtypeStruct((B, NLP), jnp.float32),
        grid_spec=grid_spec,
        compiler_params=pltpu.CompilerParams(
            # Layer axis carries the hidden state -> must run sequentially.
            dimension_semantics=("arbitrary",),
        ),
    )(emb2d, mask_add, p["emb_ln"],
      p["wqkv"], p["bqkv"], p["wo"], p["wi"], p["bi"], p["wo2"], p["lnv"],
      p["pool_w"], p["pool_b"], p["cls_w"], p["cls_b"])

    return logits_padded[:, :cfg.num_labels]


# ------------------------------- init / glue ---------------------------------

def init_params(key, cfg):
    """Deterministic synthetic BERT weights (std=0.02 normal, BERT-style),
    pre-packed for the fused kernel (QKV concatenated, per-layer stacking,
    bf16 matmul weights, f32 biases/LN params, lane-padded classifier)."""
    H, I, L = cfg.hidden, cfg.intermediate, cfg.num_layers
    NL, NLP = cfg.num_labels, cfg.logits_pad

    def nrm(k, shape):
        return 0.02 * jax.random.normal(k, shape, dtype=jnp.float32)

    keys = iter(jax.random.split(key, 64))
    p = {}
    p["word_emb"] = nrm(next(keys), (cfg.vocab_size, H))
    p["pos_emb"] = nrm(next(keys), (cfg.max_position, H))
    p["type_emb"] = nrm(next(keys), (cfg.type_vocab, H))
    p["emb_ln"] = jnp.stack([jnp.ones((H,), jnp.float32),
                             jnp.zeros((H,), jnp.float32)], axis=0)       # (2, H)

    wqkv, wo, wi, wo2 = [], [], [], []
    for _ in range(L):
        wq = nrm(next(keys), (H, H))
        wk = nrm(next(keys), (H, H))
        wv = nrm(next(keys), (H, H))
        wqkv.append(jnp.concatenate([wq, wk, wv], axis=1))                # (H, 3H)
        wo.append(nrm(next(keys), (H, H)))
        wi.append(nrm(next(keys), (H, I)))
        wo2.append(nrm(next(keys), (I, H)))

    # Matmul weights in bf16 (MXU-native on v6e/v7x, halves DMA bytes);
    # all VPU math (LN / softmax / GELU / residuals) stays in f32.
    p["wqkv"] = jnp.stack(wqkv).astype(jnp.bfloat16)                      # (L, H, 3H)
    p["wo"] = jnp.stack(wo).astype(jnp.bfloat16)                          # (L, H, H)
    p["wi"] = jnp.stack(wi).astype(jnp.bfloat16)                          # (L, H, I)
    p["wo2"] = jnp.stack(wo2).astype(jnp.bfloat16)                        # (L, I, H)

    p["bqkv"] = jnp.zeros((L, 1, 3 * H), jnp.float32)
    p["bi"] = jnp.zeros((L, 1, I), jnp.float32)
    # Packed per-layer vectors: rows = [bo, ln1_g, ln1_b, bo2, ln2_g, ln2_b]
    lnv = jnp.stack([jnp.zeros((H,), jnp.float32), jnp.ones((H,), jnp.float32),
                     jnp.zeros((H,), jnp.float32), jnp.zeros((H,), jnp.float32),
                     jnp.ones((H,), jnp.float32), jnp.zeros((H,), jnp.float32)],
                    axis=0)                                               # (6, H)
    p["lnv"] = jnp.broadcast_to(lnv[None], (L, 6, H)).astype(jnp.float32)

    p["pool_w"] = nrm(next(keys), (H, H)).astype(jnp.bfloat16)
    p["pool_b"] = jnp.zeros((1, H), jnp.float32)
    # Classifier weight/bias zero-padded to 128 lanes for an unmasked,
    # lane-dense output store; wrapper slices back to num_labels.
    cls_w = jnp.zeros((H, NLP), jnp.float32).at[:, :NL].set(
        nrm(next(keys), (H, NL)))
    p["cls_w"] = cls_w.astype(jnp.bfloat16)                               # (H, 128)
    p["cls_b"] = jnp.zeros((1, NLP), jnp.float32)                         # (1, 128)
    return p


def bert_sentiment_forward(params, input_ids, attention_mask, cfg):
    B, S = input_ids.shape
    H = cfg.hidden

    # Embedding gathers stay in plain JAX (glue).
    positions = jnp.arange(S)
    token_type = jnp.zeros((B, S), jnp.int32)
    emb = (params["word_emb"][input_ids]
           + params["pos_emb"][positions][None, :, :]
           + params["type_emb"][token_type])
    emb2d = emb.reshape(B * S, H)

    # BERT extended attention mask, kept at [B, S]; broadcast happens in-kernel.
    mask_add = (1.0 - attention_mask.astype(jnp.float32)) * -10000.0      # (B, S)

    return bert_encoder_pallas(emb2d, mask_add, params, cfg)              # (B, 3)


# ---------------------------------- main --------------------------------------

if __name__ == "__main__":
    cfg = Config()
    key = jax.random.PRNGKey(0)
    k_params, k_ids = jax.random.split(key)

    params = init_params(k_params, cfg)

    B, S = 2, 8
    input_ids = jax.random.randint(k_ids, (B, S), 0, cfg.vocab_size,
                                   dtype=jnp.int32)
    # Deterministic mask: batch 0 fully attended, batch 1 has last 3 tokens padded.
    attention_mask = jnp.array(
        [[1, 1, 1, 1, 1, 1, 1, 1],
         [1, 1, 1, 1, 1, 0, 0, 0]], dtype=jnp.int32)

    fwd = jax.jit(functools.partial(bert_sentiment_forward, cfg=cfg))
    logits = fwd(params, input_ids, attention_mask)
    logits = jax.block_until_ready(logits)

    assert logits.shape == (B, cfg.num_labels)
    assert logits.dtype == jnp.float32
    assert bool(jnp.all(jnp.isfinite(logits)))
    print("KERNEL_OK")
</pallas_src>

<mosaic_0001>
module attributes {stable_mosaic.version = 11 : i64} {
  func.func @_bert_fused_kernel(%arg0: i32, %arg1: memref<16x32xf32, #tpu.memory_space<vmem>>, %arg2: memref<2x8xf32, #tpu.memory_space<vmem>>, %arg3: memref<2x32xf32, #tpu.memory_space<vmem>>, %arg4: memref<1x32x96xbf16, #tpu.memory_space<vmem>>, %arg5: memref<1x1x96xf32, #tpu.memory_space<vmem>>, %arg6: memref<1x32x32xbf16, #tpu.memory_space<vmem>>, %arg7: memref<1x32x64xbf16, #tpu.memory_space<vmem>>, %arg8: memref<1x1x64xf32, #tpu.memory_space<vmem>>, %arg9: memref<1x64x32xbf16, #tpu.memory_space<vmem>>, %arg10: memref<1x6x32xf32, #tpu.memory_space<vmem>>, %arg11: memref<32x32xbf16, #tpu.memory_space<vmem>>, %arg12: memref<1x32xf32, #tpu.memory_space<vmem>>, %arg13: memref<32x128xbf16, #tpu.memory_space<vmem>>, %arg14: memref<1x128xf32, #tpu.memory_space<vmem>>, %arg15: memref<2x128xf32, #tpu.memory_space<vmem>>, %arg16: memref<16x32xf32, #tpu.memory_space<vmem>>) attributes {dimension_semantics = [#tpu.dimension_semantics<arbitrary>], iteration_bounds = array<i64: 2>, scalar_prefetch = 0 : i64, scratch_operands = 1 : i64, tpu.core_type = #tpu.core_type<tc>, window_params = [{pipeline_mode = #tpu.pipeline_mode<synchronous>, transform_indices = @transform_0, window_bounds = array<i64: 16, 32>}, {pipeline_mode = #tpu.pipeline_mode<synchronous>, transform_indices = @transform_1, window_bounds = array<i64: 2, 8>}, {pipeline_mode = #tpu.pipeline_mode<synchronous>, transform_indices = @transform_2, window_bounds = array<i64: 2, 32>}, {transform_indices = @transform_3, window_bounds = array<i64: 1, 32, 96>}, {transform_indices = @transform_4, window_bounds = array<i64: 1, 1, 96>}, {transform_indices = @transform_5, window_bounds = array<i64: 1, 32, 32>}, {transform_indices = @transform_6, window_bounds = array<i64: 1, 32, 64>}, {transform_indices = @transform_7, window_bounds = array<i64: 1, 1, 64>}, {transform_indices = @transform_8, window_bounds = array<i64: 1, 64, 32>}, {transform_indices = @transform_9, window_bounds = array<i64: 1, 6, 32>}, {pipeline_mode = #tpu.pipeline_mode<synchronous>, transform_indices = @transform_10, window_bounds = array<i64: 32, 32>}, {pipeline_mode = #tpu.pipeline_mode<synchronous>, transform_indices = @transform_11, window_bounds = array<i64: 1, 32>}, {pipeline_mode = #tpu.pipeline_mode<synchronous>, transform_indices = @transform_12, window_bounds = array<i64: 32, 128>}, {pipeline_mode = #tpu.pipeline_mode<synchronous>, transform_indices = @transform_13, window_bounds = array<i64: 1, 128>}, {pipeline_mode = #tpu.pipeline_mode<synchronous>, transform_indices = @transform_14, window_bounds = array<i64: 2, 128>}]} {
    %c0_i32 = arith.constant 0 : i32
    %0 = arith.cmpi eq, %arg0, %c0_i32 : i32
    %1 = arith.extui %0 : i1 to i32
    %c0_i32_0 = arith.constant 0 : i32
    %2 = arith.cmpi ne, %1, %c0_i32_0 : i32
    scf.if %2 {
      %c0_64 = arith.constant 0 : index
      %c0_65 = arith.constant 0 : index
      %198 = vector.load %arg1[%c0_64, %c0_65] : memref<16x32xf32, #tpu.memory_space<vmem>>, vector<16x32xf32>
      %c0_66 = arith.constant 0 : index
      %c0_67 = arith.constant 0 : index
      %199 = vector.load %arg3[%c0_66, %c0_67] : memref<2x32xf32, #tpu.memory_space<vmem>>, vector<1x32xf32>
      %c1 = arith.constant 1 : index
      %c0_68 = arith.constant 0 : index
      %200 = vector.load %arg3[%c1, %c0_68] : memref<2x32xf32, #tpu.memory_space<vmem>>, vector<1x32xf32>
      %cst_69 = arith.constant dense<0.000000e+00> : vector<16xf32>
      %201 = vector.multi_reduction <add>, %198, %cst_69 [1] : vector<16x32xf32> to vector<16xf32>
      %202 = vector.shape_cast %201 : vector<16xf32> to vector<16x1xf32>
      %cst_70 = arith.constant 3.200000e+01 : f32
      %203 = vector.broadcast %cst_70 : f32 to vector<16x1xf32>
      %204 = arith.divf %202, %203 : vector<16x1xf32>
      %205 = vector.broadcast %204 : vector<16x1xf32> to vector<16x32xf32>
      %206 = arith.subf %198, %205 : vector<16x32xf32>
      %207 = arith.mulf %206, %206 : vector<16x32xf32>
      %cst_71 = arith.constant dense<0.000000e+00> : vector<16xf32>
      %208 = vector.multi_reduction <add>, %207, %cst_71 [1] : vector<16x32xf32> to vector<16xf32>
      %209 = vector.shape_cast %208 : vector<16xf32> to vector<16x1xf32>
      %cst_72 = arith.constant 3.200000e+01 : f32
      %210 = vector.broadcast %cst_72 : f32 to vector<16x1xf32>
      %211 = arith.divf %209, %210 : vector<16x1xf32>
      %212 = vector.broadcast %204 : vector<16x1xf32> to vector<16x32xf32>
      %213 = arith.subf %198, %212 : vector<16x32xf32>
      %cst_73 = arith.constant 9.99999996E-13 : f32
      %214 = vector.broadcast %cst_73 : f32 to vector<16x1xf32>
      %215 = arith.addf %211, %214 : vector<16x1xf32>
      %216 = math.rsqrt %215 : vector<16x1xf32>
      %217 = vector.broadcast %216 : vector<16x1xf32> to vector<16x32xf32>
      %218 = arith.mulf %213, %217 : vector<16x32xf32>
      %219 = vector.broadcast %199 : vector<1x32xf32> to vector<16x32xf32>
      %220 = arith.mulf %218, %219 : vector<16x32xf32>
      %221 = vector.broadcast %200 : vector<1x32xf32> to vector<16x32xf32>
      %222 = arith.addf %220, %221 : vector<16x32xf32>
      %c0_74 = arith.constant 0 : index
      %c0_75 = arith.constant 0 : index
      %223 = vector.load %arg16[%c0_74, %c0_75] : memref<16x32xf32, #tpu.memory_space<vmem>>, vector<16x32xf32>
      tpu.vector_store %arg16[%c0_74, %c0_75], %222 {strides = array<i32>} : memref<16x32xf32, #tpu.memory_space<vmem>>, vector<16x32xf32>,
    } else {
    }
    %c0 = arith.constant 0 : index
    %c0_1 = arith.constant 0 : index
    %3 = vector.load %arg16[%c0, %c0_1] : memref<16x32xf32, #tpu.memory_space<vmem>>, vector<16x32xf32>
    %4 = arith.truncf %3 : vector<16x32xf32> to vector<16x32xbf16>
    %c0_2 = arith.constant 0 : index
    %c0_3 = arith.constant 0 : index
    %c0_4 = arith.constant 0 : index
    %5 = vector.load %arg4[%c0_2, %c0_3, %c0_4] : memref<1x32x96xbf16, #tpu.memory_space<vmem>>, vector<1x32x96xbf16>
    %6 = vector.shape_cast %5 : vector<1x32x96xbf16> to vector<32x96xbf16>
    %cst = arith.constant dense<0.000000e+00> : vector<16x96xf32>
    %7 = tpu.matmul %4, %6, %cst {dimension_numbers = #tpu.dot_dimension_numbers<[1], [0], [0], [1], [0, 0, 1, 1], [], []>} : vector<16x32xbf16>, vector<32x96xbf16>, vector<16x96xf32> -> vector<16x96xf32>
    %c0_5 = arith.constant 0 : index
    %c0_6 = arith.constant 0 : index
    %c0_7 = arith.constant 0 : index
    %8 = vector.load %arg5[%c0_5, %c0_6, %c0_7] : memref<1x1x96xf32, #tpu.memory_space<vmem>>, vector<1x1x96xf32>
    %9 = vector.shape_cast %8 : vector<1x1x96xf32> to vector<1x96xf32>
    %10 = vector.broadcast %9 : vector<1x96xf32> to vector<16x96xf32>
    %11 = arith.addf %7, %10 : vector<16x96xf32>
    %12 = arith.truncf %11 : vector<16x96xf32> to vector<16x96xbf16>
    %c0_8 = arith.constant 0 : index
    %c0_9 = arith.constant 0 : index
    %13 = vector.load %arg2[%c0_8, %c0_9] : memref<2x8xf32, #tpu.memory_space<vmem>>, vector<2x8xf32>
    %14 = vector.shape_cast %13 : vector<2x8xf32> to vector<2x1x8xf32>
    %15 = vector.extract_strided_slice %12 {offsets = [0, 0], sizes = [16, 8], strides = [1, 1]} : vector<16x96xbf16> to vector<16x8xbf16>
    %16 = vector.shape_cast %15 : vector<16x8xbf16> to vector<2x8x8xbf16>
    %17 = vector.extract_strided_slice %12 {offsets = [0, 32], sizes = [16, 8], strides = [1, 1]} : vector<16x96xbf16> to vector<16x8xbf16>
    %18 = vector.shape_cast %17 : vector<16x8xbf16> to vector<2x8x8xbf16>
    %19 = vector.extract_strided_slice %12 {offsets = [0, 64], sizes = [16, 8], strides = [1, 1]} : vector<16x96xbf16> to vector<16x8xbf16>
    %20 = vector.shape_cast %19 : vector<16x8xbf16> to vector<2x8x8xbf16>
    "tpu.trace_start"() <{level = 10 : i32, message = "bqd,bkd->bqk"}> : () -> ()
    %cst_10 = arith.constant dense<0.000000e+00> : vector<2x8x8xf32>
    %21 = tpu.matmul %16, %18, %cst_10 {dimension_numbers = #tpu.dot_dimension_numbers<[2], [2], [1], [1], [0, 0, 0, 1, 1, 1], [0], [0]>} : vector<2x8x8xbf16>, vector<2x8x8xbf16>, vector<2x8x8xf32> -> vector<2x8x8xf32>
    "tpu.trace_stop"() : () -> ()
    %cst_11 = arith.constant 0.353553385 : f32
    %22 = vector.broadcast %cst_11 : f32 to vector<2x8x8xf32>
    %23 = arith.mulf %21, %22 : vector<2x8x8xf32>
    %24 = vector.broadcast %14 : vector<2x1x8xf32> to vector<2x8x8xf32>
    %25 = arith.addf %23, %24 : vector<2x8x8xf32>
    %cst_12 = arith.constant dense<0xFF800000> : vector<2x8xf32>
    %26 = vector.multi_reduction <maximumf>, %25, %cst_12 [2] : vector<2x8x8xf32> to vector<2x8xf32>
    %27 = vector.shape_cast %26 : vector<2x8xf32> to vector<2x8x1xf32>
    %28 = vector.broadcast %27 : vector<2x8x1xf32> to vector<2x8x8xf32>
    %29 = arith.subf %25, %28 : vector<2x8x8xf32>
    %30 = math.exp %29 : vector<2x8x8xf32>
    %cst_13 = arith.constant dense<0.000000e+00> : vector<2x8xf32>
    %31 = vector.multi_reduction <add>, %30, %cst_13 [2] : vector<2x8x8xf32> to vector<2x8xf32>
    %32 = vector.shape_cast %31 : vector<2x8xf32> to vector<2x8x1xf32>
    %33 = tpu.reciprocal %32 {approx = true} : vector<2x8x1xf32> -> vector<2x8x1xf32>
    %34 = vector.broadcast %33 : vector<2x8x1xf32> to vector<2x8x8xf32>
    %35 = arith.mulf %30, %34 : vector<2x8x8xf32>
    %36 = arith.truncf %35 : vector<2x8x8xf32> to vector<2x8x8xbf16>
    "tpu.trace_start"() <{level = 10 : i32, message = "bqk,bkd->bqd"}> : () -> ()
    %cst_14 = arith.constant dense<0.000000e+00> : vector<2x8x8xf32>
    %37 = tpu.matmul %36, %20, %cst_14 {dimension_numbers = #tpu.dot_dimension_numbers<[2], [1], [1], [2], [0, 0, 0, 1, 1, 2], [0], [0]>} : vector<2x8x8xbf16>, vector<2x8x8xbf16>, vector<2x8x8xf32> -> vector<2x8x8xf32>
    "tpu.trace_stop"() : () -> ()
    %38 = vector.shape_cast %37 : vector<2x8x8xf32> to vector<16x8xf32>
    %39 = vector.extract_strided_slice %12 {offsets = [0, 8], sizes = [16, 8], strides = [1, 1]} : vector<16x96xbf16> to vector<16x8xbf16>
    %40 = vector.shape_cast %39 : vector<16x8xbf16> to vector<2x8x8xbf16>
    %41 = vector.extract_strided_slice %12 {offsets = [0, 40], sizes = [16, 8], strides = [1, 1]} : vector<16x96xbf16> to vector<16x8xbf16>
    %42 = vector.shape_cast %41 : vector<16x8xbf16> to vector<2x8x8xbf16>
    %43 = vector.extract_strided_slice %12 {offsets = [0, 72], sizes = [16, 8], strides = [1, 1]} : vector<16x96xbf16> to vector<16x8xbf16>
    %44 = vector.shape_cast %43 : vector<16x8xbf16> to vector<2x8x8xbf16>
    "tpu.trace_start"() <{level = 10 : i32, message = "bqd,bkd->bqk"}> : () -> ()
    %cst_15 = arith.constant dense<0.000000e+00> : vector<2x8x8xf32>
    %45 = tpu.matmul %40, %42, %cst_15 {dimension_numbers = #tpu.dot_dimension_numbers<[2], [2], [1], [1], [0, 0, 0, 1, 1, 1], [0], [0]>} : vector<2x8x8xbf16>, vector<2x8x8xbf16>, vector<2x8x8xf32> -> vector<2x8x8xf32>
    "tpu.trace_stop"() : () -> ()
    %cst_16 = arith.constant 0.353553385 : f32
    %46 = vector.broadcast %cst_16 : f32 to vector<2x8x8xf32>
    %47 = arith.mulf %45, %46 : vector<2x8x8xf32>
    %48 = vector.broadcast %14 : vector<2x1x8xf32> to vector<2x8x8xf32>
    %49 = arith.addf %47, %48 : vector<2x8x8xf32>
    %cst_17 = arith.constant dense<0xFF800000> : vector<2x8xf32>
    %50 = vector.multi_reduction <maximumf>, %49, %cst_17 [2] : vector<2x8x8xf32> to vector<2x8xf32>
    %51 = vector.shape_cast %50 : vector<2x8xf32> to vector<2x8x1xf32>
    %52 = vector.broadcast %51 : vector<2x8x1xf32> to vector<2x8x8xf32>
    %53 = arith.subf %49, %52 : vector<2x8x8xf32>
    %54 = math.exp %53 : vector<2x8x8xf32>
    %cst_18 = arith.constant dense<0.000000e+00> : vector<2x8xf32>
    %55 = vector.multi_reduction <add>, %54, %cst_18 [2] : vector<2x8x8xf32> to vector<2x8xf32>
    %56 = vector.shape_cast %55 : vector<2x8xf32> to vector<2x8x1xf32>
    %57 = tpu.reciprocal %56 {approx = true} : vector<2x8x1xf32> -> vector<2x8x1xf32>
    %58 = vector.broadcast %57 : vector<2x8x1xf32> to vector<2x8x8xf32>
    %59 = arith.mulf %54, %58 : vector<2x8x8xf32>
    %60 = arith.truncf %59 : vector<2x8x8xf32> to vector<2x8x8xbf16>
    "tpu.trace_start"() <{level = 10 : i32, message = "bqk,bkd->bqd"}> : () -> ()
    %cst_19 = arith.constant dense<0.000000e+00> : vector<2x8x8xf32>
    %61 = tpu.matmul %60, %44, %cst_19 {dimension_numbers = #tpu.dot_dimension_numbers<[2], [1], [1], [2], [0, 0, 0, 1, 1, 2], [0], [0]>} : vector<2x8x8xbf16>, vector<2x8x8xbf16>, vector<2x8x8xf32> -> vector<2x8x8xf32>
    "tpu.trace_stop"() : () -> ()
    %62 = vector.shape_cast %61 : vector<2x8x8xf32> to vector<16x8xf32>
    %63 = vector.extract_strided_slice %12 {offsets = [0, 16], sizes = [16, 8], strides = [1, 1]} : vector<16x96xbf16> to vector<16x8xbf16>
    %64 = vector.shape_cast %63 : vector<16x8xbf16> to vector<2x8x8xbf16>
    %65 = vector.extract_strided_slice %12 {offsets = [0, 48], sizes = [16, 8], strides = [1, 1]} : vector<16x96xbf16> to vector<16x8xbf16>
    %66 = vector.shape_cast %65 : vector<16x8xbf16> to vector<2x8x8xbf16>
    %67 = vector.extract_strided_slice %12 {offsets = [0, 80], sizes = [16, 8], strides = [1, 1]} : vector<16x96xbf16> to vector<16x8xbf16>
    %68 = vector.shape_cast %67 : vector<16x8xbf16> to vector<2x8x8xbf16>
    "tpu.trace_start"() <{level = 10 : i32, message = "bqd,bkd->bqk"}> : () -> ()
    %cst_20 = arith.constant dense<0.000000e+00> : vector<2x8x8xf32>
    %69 = tpu.matmul %64, %66, %cst_20 {dimension_numbers = #tpu.dot_dimension_numbers<[2], [2], [1], [1], [0, 0, 0, 1, 1, 1], [0], [0]>} : vector<2x8x8xbf16>, vector<2x8x8xbf16>, vector<2x8x8xf32> -> vector<2x8x8xf32>
    "tpu.trace_stop"() : () -> ()
    %cst_21 = arith.constant 0.353553385 : f32
    %70 = vector.broadcast %cst_21 : f32 to vector<2x8x8xf32>
    %71 = arith.mulf %69, %70 : vector<2x8x8xf32>
    %72 = vector.broadcast %14 : vector<2x1x8xf32> to vector<2x8x8xf32>
    %73 = arith.addf %71, %72 : vector<2x8x8xf32>
    %cst_22 = arith.constant dense<0xFF800000> : vector<2x8xf32>
    %74 = vector.multi_reduction <maximumf>, %73, %cst_22 [2] : vector<2x8x8xf32> to vector<2x8xf32>
    %75 = vector.shape_cast %74 : vector<2x8xf32> to vector<2x8x1xf32>
    %76 = vector.broadcast %75 : vector<2x8x1xf32> to vector<2x8x8xf32>
    %77 = arith.subf %73, %76 : vector<2x8x8xf32>
    %78 = math.exp %77 : vector<2x8x8xf32>
    %cst_23 = arith.constant dense<0.000000e+00> : vector<2x8xf32>
    %79 = vector.multi_reduction <add>, %78, %cst_23 [2] : vector<2x8x8xf32> to vector<2x8xf32>
    %80 = vector.shape_cast %79 : vector<2x8xf32> to vector<2x8x1xf32>
    %81 = tpu.reciprocal %80 {approx = true} : vector<2x8x1xf32> -> vector<2x8x1xf32>
    %82 = vector.broadcast %81 : vector<2x8x1xf32> to vector<2x8x8xf32>
    %83 = arith.mulf %78, %82 : vector<2x8x8xf32>
    %84 = arith.truncf %83 : vector<2x8x8xf32> to vector<2x8x8xbf16>
    "tpu.trace_start"() <{level = 10 : i32, message = "bqk,bkd->bqd"}> : () -> ()
    %cst_24 = arith.constant dense<0.000000e+00> : vector<2x8x8xf32>
    %85 = tpu.matmul %84, %68, %cst_24 {dimension_numbers = #tpu.dot_dimension_numbers<[2], [1], [1], [2], [0, 0, 0, 1, 1, 2], [0], [0]>} : vector<2x8x8xbf16>, vector<2x8x8xbf16>, vector<2x8x8xf32> -> vector<2x8x8xf32>
    "tpu.trace_stop"() : () -> ()
    %86 = vector.shape_cast %85 : vector<2x8x8xf32> to vector<16x8xf32>
    %87 = vector.extract_strided_slice %12 {offsets = [0, 24], sizes = [16, 8], strides = [1, 1]} : vector<16x96xbf16> to vector<16x8xbf16>
    %88 = vector.shape_cast %87 : vector<16x8xbf16> to vector<2x8x8xbf16>
    %89 = vector.extract_strided_slice %12 {offsets = [0, 56], sizes = [16, 8], strides = [1, 1]} : vector<16x96xbf16> to vector<16x8xbf16>
    %90 = vector.shape_cast %89 : vector<16x8xbf16> to vector<2x8x8xbf16>
    %91 = vector.extract_strided_slice %12 {offsets = [0, 88], sizes = [16, 8], strides = [1, 1]} : vector<16x96xbf16> to vector<16x8xbf16>
    %92 = vector.shape_cast %91 : vector<16x8xbf16> to vector<2x8x8xbf16>
    "tpu.trace_start"() <{level = 10 : i32, message = "bqd,bkd->bqk"}> : () -> ()
    %cst_25 = arith.constant dense<0.000000e+00> : vector<2x8x8xf32>
    %93 = tpu.matmul %88, %90, %cst_25 {dimension_numbers = #tpu.dot_dimension_numbers<[2], [2], [1], [1], [0, 0, 0, 1, 1, 1], [0], [0]>} : vector<2x8x8xbf16>, vector<2x8x8xbf16>, vector<2x8x8xf32> -> vector<2x8x8xf32>
    "tpu.trace_stop"() : () -> ()
    %cst_26 = arith.constant 0.353553385 : f32
    %94 = vector.broadcast %cst_26 : f32 to vector<2x8x8xf32>
    %95 = arith.mulf %93, %94 : vector<2x8x8xf32>
    %96 = vector.broadcast %14 : vector<2x1x8xf32> to vector<2x8x8xf32>
    %97 = arith.addf %95, %96 : vector<2x8x8xf32>
    %cst_27 = arith.constant dense<0xFF800000> : vector<2x8xf32>
    %98 = vector.multi_reduction <maximumf>, %97, %cst_27 [2] : vector<2x8x8xf32> to vector<2x8xf32>
    %99 = vector.shape_cast %98 : vector<2x8xf32> to vector<2x8x1xf32>
    %100 = vector.broadcast %99 : vector<2x8x1xf32> to vector<2x8x8xf32>
    %101 = arith.subf %97, %100 : vector<2x8x8xf32>
    %102 = math.exp %101 : vector<2x8x8xf32>
    %cst_28 = arith.constant dense<0.000000e+00> : vector<2x8xf32>
    %103 = vector.multi_reduction <add>, %102, %cst_28 [2] : vector<2x8x8xf32> to vector<2x8xf32>
    %104 = vector.shape_cast %103 : vector<2x8xf32> to vector<2x8x1xf32>
    %105 = tpu.reciprocal %104 {approx = true} : vector<2x8x1xf32> -> vector<2x8x1xf32>
    %106 = vector.broadcast %105 : vector<2x8x1xf32> to vector<2x8x8xf32>
    %107 = arith.mulf %102, %106 : vector<2x8x8xf32>
    %108 = arith.truncf %107 : vector<2x8x8xf32> to vector<2x8x8xbf16>
    "tpu.trace_start"() <{level = 10 : i32, message = "bqk,bkd->bqd"}> : () -> ()
    %cst_29 = arith.constant dense<0.000000e+00> : vector<2x8x8xf32>
    %109 = tpu.matmul %108, %92, %cst_29 {dimension_numbers = #tpu.dot_dimension_numbers<[2], [1], [1], [2], [0, 0, 0, 1, 1, 2], [0], [0]>} : vector<2x8x8xbf16>, vector<2x8x8xbf16>, vector<2x8x8xf32> -> vector<2x8x8xf32>
    "tpu.trace_stop"() : () -> ()
    %110 = vector.shape_cast %109 : vector<2x8x8xf32> to vector<16x8xf32>
    %111 = tpu.concatenate %38, %62, %86, %110 in 1 : vector<16x8xf32>, vector<16x8xf32>, vector<16x8xf32>, vector<16x8xf32> -> vector<16x32xf32>
    %112 = arith.truncf %111 : vector<16x32xf32> to vector<16x32xbf16>
    %c0_30 = arith.constant 0 : index
    %c0_31 = arith.constant 0 : index
    %c0_32 = arith.constant 0 : index
    %113 = vector.load %arg10[%c0_30, %c0_31, %c0_32] : memref<1x6x32xf32, #tpu.memory_space<vmem>>, vector<1x6x32xf32>
    %114 = vector.shape_cast %113 : vector<1x6x32xf32> to vector<6x32xf32>
    %115 = vector.extract_strided_slice %114 {offsets = [0, 0], sizes = [1, 32], strides = [1, 1]} : vector<6x32xf32> to vector<1x32xf32>
    %116 = vector.extract_strided_slice %114 {offsets = [1, 0], sizes = [1, 32], strides = [1, 1]} : vector<6x32xf32> to vector<1x32xf32>
    %117 = vector.extract_strided_slice %114 {offsets = [2, 0], sizes = [1, 32], strides = [1, 1]} : vector<6x32xf32> to vector<1x32xf32>
    %118 = vector.extract_strided_slice %114 {offsets = [3, 0], sizes = [1, 32], strides = [1, 1]} : vector<6x32xf32> to vector<1x32xf32>
    %119 = vector.extract_strided_slice %114 {offsets = [4, 0], sizes = [1, 32], strides = [1, 1]} : vector<6x32xf32> to vector<1x32xf32>
    %120 = vector.extract_strided_slice %114 {offsets = [5, 0], sizes = [1, 32], strides = [1, 1]} : vector<6x32xf32> to vector<1x32xf32>
    %c0_33 = arith.constant 0 : index
    %c0_34 = arith.constant 0 : index
    %c0_35 = arith.constant 0 : index
    %121 = vector.load %arg6[%c0_33, %c0_34, %c0_35] : memref<1x32x32xbf16, #tpu.memory_space<vmem>>, vector<1x32x32xbf16>
    %122 = vector.shape_cast %121 : vector<1x32x32xbf16> to vector<32x32xbf16>
    %cst_36 = arith.constant dense<0.000000e+00> : vector<16x32xf32>
    %123 = tpu.matmul %112, %122, %cst_36 {dimension_numbers = #tpu.dot_dimension_numbers<[1], [0], [0], [1], [0, 0, 1, 1], [], []>} : vector<16x32xbf16>, vector<32x32xbf16>, vector<16x32xf32> -> vector<16x32xf32>
    %124 = vector.broadcast %115 : vector<1x32xf32> to vector<16x32xf32>
    %125 = arith.addf %123, %124 : vector<16x32xf32>
    %126 = arith.addf %125, %3 : vector<16x32xf32>
    %cst_37 = arith.constant dense<0.000000e+00> : vector<16xf32>
    %127 = vector.multi_reduction <add>, %126, %cst_37 [1] : vector<16x32xf32> to vector<16xf32>
    %128 = vector.shape_cast %127 : vector<16xf32> to vector<16x1xf32>
    %cst_38 = arith.constant 3.200000e+01 : f32
    %129 = vector.broadcast %cst_38 : f32 to vector<16x1xf32>
    %130 = arith.divf %128, %129 : vector<16x1xf32>
    %131 = vector.broadcast %130 : vector<16x1xf32> to vector<16x32xf32>
    %132 = arith.subf %126, %131 : vector<16x32xf32>
    %133 = arith.mulf %132, %132 : vector<16x32xf32>
    %cst_39 = arith.constant dense<0.000000e+00> : vector<16xf32>
    %134 = vector.multi_reduction <add>, %133, %cst_39 [1] : vector<16x32xf32> to vector<16xf32>
    %135 = vector.shape_cast %134 : vector<16xf32> to vector<16x1xf32>
    %cst_40 = arith.constant 3.200000e+01 : f32
    %136 = vector.broadcast %cst_40 : f32 to vector<16x1xf32>
    %137 = arith.divf %135, %136 : vector<16x1xf32>
    %138 = vector.broadcast %130 : vector<16x1xf32> to vector<16x32xf32>
    %139 = arith.subf %126, %138 : vector<16x32xf32>
    %cst_41 = arith.constant 9.99999996E-13 : f32
    %140 = vector.broadcast %cst_41 : f32 to vector<16x1xf32>
    %141 = arith.addf %137, %140 : vector<16x1xf32>
    %142 = math.rsqrt %141 : vector<16x1xf32>
    %143 = vector.broadcast %142 : vector<16x1xf32> to vector<16x32xf32>
    %144 = arith.mulf %139, %143 : vector<16x32xf32>
    %145 = vector.broadcast %116 : vector<1x32xf32> to vector<16x32xf32>
    %146 = arith.mulf %144, %145 : vector<16x32xf32>
    %147 = vector.broadcast %117 : vector<1x32xf32> to vector<16x32xf32>
    %148 = arith.addf %146, %147 : vector<16x32xf32>
    %149 = arith.truncf %148 : vector<16x32xf32> to vector<16x32xbf16>
    %c0_42 = arith.constant 0 : index
    %c0_43 = arith.constant 0 : index
    %c0_44 = arith.constant 0 : index
    %150 = vector.load %arg7[%c0_42, %c0_43, %c0_44] : memref<1x32x64xbf16, #tpu.memory_space<vmem>>, vector<1x32x64xbf16>
    %151 = vector.shape_cast %150 : vector<1x32x64xbf16> to vector<32x64xbf16>
    %cst_45 = arith.constant dense<0.000000e+00> : vector<16x64xf32>
    %152 = tpu.matmul %149, %151, %cst_45 {dimension_numbers = #tpu.dot_dimension_numbers<[1], [0], [0], [1], [0, 0, 1, 1], [], []>} : vector<16x32xbf16>, vector<32x64xbf16>, vector<16x64xf32> -> vector<16x64xf32>
    %c0_46 = arith.constant 0 : index
    %c0_47 = arith.constant 0 : index
    %c0_48 = arith.constant 0 : index
    %153 = vector.load %arg8[%c0_46, %c0_47, %c0_48] : memref<1x1x64xf32, #tpu.memory_space<vmem>>, vector<1x1x64xf32>
    %154 = vector.shape_cast %153 : vector<1x1x64xf32> to vector<1x64xf32>
    %155 = vector.broadcast %154 : vector<1x64xf32> to vector<16x64xf32>
    %156 = arith.addf %152, %155 : vector<16x64xf32>
    %cst_49 = arith.constant 5.000000e-01 : f32
    %157 = vector.broadcast %cst_49 : f32 to vector<16x64xf32>
    %158 = arith.mulf %157, %156 : vector<16x64xf32>
    %cst_50 = arith.constant 0.707106769 : f32
    %159 = vector.broadcast %cst_50 : f32 to vector<16x64xf32>
    %160 = arith.mulf %156, %159 : vector<16x64xf32>
    %161 = math.erf %160 : vector<16x64xf32>
    %cst_51 = arith.constant 1.000000e+00 : f32
    %162 = vector.broadcast %cst_51 : f32 to vector<16x64xf32>
    %163 = arith.addf %162, %161 : vector<16x64xf32>
    %164 = arith.mulf %158, %163 : vector<16x64xf32>
    %165 = arith.truncf %164 : vector<16x64xf32> to vector<16x64xbf16>
    %c0_52 = arith.constant 0 : index
    %c0_53 = arith.constant 0 : index
    %c0_54 = arith.constant 0 : index
    %166 = vector.load %arg9[%c0_52, %c0_53, %c0_54] : memref<1x64x32xbf16, #tpu.memory_space<vmem>>, vector<1x64x32xbf16>
    %167 = vector.shape_cast %166 : vector<1x64x32xbf16> to vector<64x32xbf16>
    %cst_55 = arith.constant dense<0.000000e+00> : vector<16x32xf32>
    %168 = tpu.matmul %165, %167, %cst_55 {dimension_numbers = #tpu.dot_dimension_numbers<[1], [0], [0], [1], [0, 0, 1, 1], [], []>} : vector<16x64xbf16>, vector<64x32xbf16>, vector<16x32xf32> -> vector<16x32xf32>
    %169 = vector.broadcast %118 : vector<1x32xf32> to vector<16x32xf32>
    %170 = arith.addf %168, %169 : vector<16x32xf32>
    %171 = arith.addf %170, %148 : vector<16x32xf32>
    %cst_56 = arith.constant dense<0.000000e+00> : vector<16xf32>
    %172 = vector.multi_reduction <add>, %171, %cst_56 [1] : vector<16x32xf32> to vector<16xf32>
    %173 = vector.shape_cast %172 : vector<16xf32> to vector<16x1xf32>
    %cst_57 = arith.constant 3.200000e+01 : f32
    %174 = vector.broadcast %cst_57 : f32 to vector<16x1xf32>
    %175 = arith.divf %173, %174 : vector<16x1xf32>
    %176 = vector.broadcast %175 : vector<16x1xf32> to vector<16x32xf32>
    %177 = arith.subf %171, %176 : vector<16x32xf32>
    %178 = arith.mulf %177, %177 : vector<16x32xf32>
    %cst_58 = arith.constant dense<0.000000e+00> : vector<16xf32>
    %179 = vector.multi_reduction <add>, %178, %cst_58 [1] : vector<16x32xf32> to vector<16xf32>
    %180 = vector.shape_cast %179 : vector<16xf32> to vector<16x1xf32>
    %cst_59 = arith.constant 3.200000e+01 : f32
    %181 = vector.broadcast %cst_59 : f32 to vector<16x1xf32>
    %182 = arith.divf %180, %181 : vector<16x1xf32>
    %183 = vector.broadcast %175 : vector<16x1xf32> to vector<16x32xf32>
    %184 = arith.subf %171, %183 : vector<16x32xf32>
    %cst_60 = arith.constant 9.99999996E-13 : f32
    %185 = vector.broadcast %cst_60 : f32 to vector<16x1xf32>
    %186 = arith.addf %182, %185 : vector<16x1xf32>
    %187 = math.rsqrt %186 : vector<16x1xf32>
    %188 = vector.broadcast %187 : vector<16x1xf32> to vector<16x32xf32>
    %189 = arith.mulf %184, %188 : vector<16x32xf32>
    %190 = vector.broadcast %119 : vector<1x32xf32> to vector<16x32xf32>
    %191 = arith.mulf %189, %190 : vector<16x32xf32>
    %192 = vector.broadcast %120 : vector<1x32xf32> to vector<16x32xf32>
    %193 = arith.addf %191, %192 : vector<16x32xf32>
    %c0_61 = arith.constant 0 : index
    %c0_62 = arith.constant 0 : index
    %194 = vector.load %arg16[%c0_61, %c0_62] : memref<16x32xf32, #tpu.memory_space<vmem>>, vector<16x32xf32>
    tpu.vector_store %arg16[%c0_61, %c0_62], %193 {strides = array<i32>} : memref<16x32xf32, #tpu.memory_space<vmem>>, vector<16x32xf32>,
    %c1_i32 = arith.constant 1 : i32
    %195 = arith.cmpi eq, %arg0, %c1_i32 : i32
    %196 = arith.extui %195 : i1 to i32
    %c0_i32_63 = arith.constant 0 : i32
    %197 = arith.cmpi ne, %196, %c0_i32_63 : i32
    scf.if %197 {
      %c0_64 = arith.constant 0 : index
      %c0_65 = arith.constant 0 : index
      %198 = tpu.strided_load %arg16[%c0_64, %c0_65] {strides = array<i32: 8, 1>} : memref<16x32xf32, #tpu.memory_space<vmem>>, vector<2x32xf32>
      %199 = arith.truncf %198 : vector<2x32xf32> to vector<2x32xbf16>
      %c0_66 = arith.constant 0 : index
      %c0_67 = arith.constant 0 : index
      %200 = vector.load %arg11[%c0_66, %c0_67] : memref<32x32xbf16, #tpu.memory_space<vmem>>, vector<32x32xbf16>
      %cst_68 = arith.constant dense<0.000000e+00> : vector<2x32xf32>
      %201 = tpu.matmul %199, %200, %cst_68 {dimension_numbers = #tpu.dot_dimension_numbers<[1], [0], [0], [1], [0, 0, 1, 1], [], []>} : vector<2x32xbf16>, vector<32x32xbf16>, vector<2x32xf32> -> vector<2x32xf32>
      %c0_69 = arith.constant 0 : index
      %c0_70 = arith.constant 0 : index
      %202 = vector.load %arg12[%c0_69, %c0_70] : memref<1x32xf32, #tpu.memory_space<vmem>>, vector<1x32xf32>
      %203 = vector.broadcast %202 : vector<1x32xf32> to vector<2x32xf32>
      %204 = arith.addf %201, %203 : vector<2x32xf32>
      %205 = math.tanh %204 : vector<2x32xf32>
      %206 = arith.truncf %205 : vector<2x32xf32> to vector<2x32xbf16>
      %c0_71 = arith.constant 0 : index
      %c0_72 = arith.constant 0 : index
      %207 = vector.load %arg13[%c0_71, %c0_72] : memref<32x128xbf16, #tpu.memory_space<vmem>>, vector<32x128xbf16>
      %cst_73 = arith.constant dense<0.000000e+00> : vector<2x128xf32>
      %208 = tpu.matmul %206, %207, %cst_73 {dimension_numbers = #tpu.dot_dimension_numbers<[1], [0], [0], [1], [0, 0, 1, 1], [], []>} : vector<2x32xbf16>, vector<32x128xbf16>, vector<2x128xf32> -> vector<2x128xf32>
      %c0_74 = arith.constant 0 : index
      %c0_75 = arith.constant 0 : index
      %209 = vector.load %arg14[%c0_74, %c0_75] : memref<1x128xf32, #tpu.memory_space<vmem>>, vector<1x128xf32>
      %210 = vector.broadcast %209 : vector<1x128xf32> to vector<2x128xf32>
      %211 = arith.addf %208, %210 : vector<2x128xf32>
      %c0_76 = arith.constant 0 : index
      %c0_77 = arith.constant 0 : index
      %212 = vector.load %arg15[%c0_76, %c0_77] : memref<2x128xf32, #tpu.memory_space<vmem>>, vector<2x128xf32>
      tpu.vector_store %arg15[%c0_76, %c0_77], %211 {strides = array<i32>} : memref<2x128xf32, #tpu.memory_space<vmem>>, vector<2x128xf32>,
    } else {
    }
    return
  }
  func.func @transform_0(%arg0: i32) -> (i32, i32) {
    %c0_i32 = arith.constant 0 : i32
    %c0_i32_0 = arith.constant 0 : i32
    %c0_i32_1 = arith.constant 0 : i32
    return %c0_i32, %c0_i32_0 : i32, i32
  }
  func.func @transform_1(%arg0: i32) -> (i32, i32) {
    %c0_i32 = arith.constant 0 : i32
    %c0_i32_0 = arith.constant 0 : i32
    %c0_i32_1 = arith.constant 0 : i32
    return %c0_i32, %c0_i32_0 : i32, i32
  }
  func.func @transform_2(%arg0: i32) -> (i32, i32) {
    %c0_i32 = arith.constant 0 : i32
    %c0_i32_0 = arith.constant 0 : i32
    %c0_i32_1 = arith.constant 0 : i32
    return %c0_i32, %c0_i32_0 : i32, i32
  }
  func.func @transform_3(%arg0: i32) -> (i32, i32, i32) {
    %c0_i32 = arith.constant 0 : i32
    %c0_i32_0 = arith.constant 0 : i32
    %c0_i32_1 = arith.constant 0 : i32
    return %arg0, %c0_i32, %c0_i32_0 : i32, i32, i32
  }
  func.func @transform_4(%arg0: i32) -> (i32, i32, i32) {
    %c0_i32 = arith.constant 0 : i32
    %c0_i32_0 = arith.constant 0 : i32
    %c0_i32_1 = arith.constant 0 : i32
    return %arg0, %c0_i32, %c0_i32_0 : i32, i32, i32
  }
  func.func @transform_5(%arg0: i32) -> (i32, i32, i32) {
    %c0_i32 = arith.constant 0 : i32
    %c0_i32_0 = arith.constant 0 : i32
    %c0_i32_1 = arith.constant 0 : i32
    return %arg0, %c0_i32, %c0_i32_0 : i32, i32, i32
  }
  func.func @transform_6(%arg0: i32) -> (i32, i32, i32) {
    %c0_i32 = arith.constant 0 : i32
    %c0_i32_0 = arith.constant 0 : i32
    %c0_i32_1 = arith.constant 0 : i32
    return %arg0, %c0_i32, %c0_i32_0 : i32, i32, i32
  }
  func.func @transform_7(%arg0: i32) -> (i32, i32, i32) {
    %c0_i32 = arith.constant 0 : i32
    %c0_i32_0 = arith.constant 0 : i32
    %c0_i32_1 = arith.constant 0 : i32
    return %arg0, %c0_i32, %c0_i32_0 : i32, i32, i32
  }
  func.func @transform_8(%arg0: i32) -> (i32, i32, i32) {
    %c0_i32 = arith.constant 0 : i32
    %c0_i32_0 = arith.constant 0 : i32
    %c0_i32_1 = arith.constant 0 : i32
    return %arg0, %c0_i32, %c0_i32_0 : i32, i32, i32
  }
  func.func @transform_9(%arg0: i32) -> (i32, i32, i32) {
    %c0_i32 = arith.constant 0 : i32
    %c0_i32_0 = arith.constant 0 : i32
    %c0_i32_1 = arith.constant 0 : i32
    return %arg0, %c0_i32, %c0_i32_0 : i32, i32, i32
  }
  func.func @transform_10(%arg0: i32) -> (i32, i32) {
    %c0_i32 = arith.constant 0 : i32
    %c0_i32_0 = arith.constant 0 : i32
    %c0_i32_1 = arith.constant 0 : i32
    return %c0_i32, %c0_i32_0 : i32, i32
  }
  func.func @transform_11(%arg0: i32) -> (i32, i32) {
    %c0_i32 = arith.constant 0 : i32
    %c0_i32_0 = arith.constant 0 : i32
    %c0_i32_1 = arith.constant 0 : i32
    return %c0_i32, %c0_i32_0 : i32, i32
  }
  func.func @transform_12(%arg0: i32) -> (i32, i32) {
    %c0_i32 = arith.constant 0 : i32
    %c0_i32_0 = arith.constant 0 : i32
    %c0_i32_1 = arith.constant 0 : i32
    return %c0_i32, %c0_i32_0 : i32, i32
  }
  func.func @transform_13(%arg0: i32) -> (i32, i32) {
    %c0_i32 = arith.constant 0 : i32
    %c0_i32_0 = arith.constant 0 : i32
    %c0_i32_1 = arith.constant 0 : i32
    return %c0_i32, %c0_i32_0 : i32, i32
  }
  func.func @transform_14(%arg0: i32) -> (i32, i32) {
    %c0_i32 = arith.constant 0 : i32
    %c0_i32_0 = arith.constant 0 : i32
    %c0_i32_1 = arith.constant 0 : i32
    return %c0_i32, %c0_i32_0 : i32, i32
  }
}

</mosaic_0001>

<llo_original>
// kernel: bert_sentiment_forward.1
$region0: #{bert_sentiment_forward.1}
  #allocation0 [shape = 'u32[]', space=smem, size = 0x4, offset = 0x4, fixed_abs, tag = 'smem constant byte address 0x4 - core index']
  #allocation1 [shape = 'u32[144,128]{1,0:T(1,128)}', space=vmem, size = 0x12000, scoped, tag = 'internal scratch']
  #allocation2 [shape = 'f32[16,32]{1,0:T(8,128)}', space=vmem, size = 0x2000, scoped, tag = 'scratch operand']
  %s0 = inlined_call_operand.vmem [shape: f32[16,32], index: 0, kind: input, shape index: {}]
  %s1 = inlined_call_operand.vmem [shape: f32[2,8], index: 1, kind: input, shape index: {}]
  %s2 = inlined_call_operand.vmem [shape: f32[2,32], index: 2, kind: input, shape index: {}]
  %s3 = inlined_call_operand.vmem [shape: bf16[2,32,96], index: 3, kind: input, shape index: {}]
  %s4 = inlined_call_operand.vmem [shape: f32[2,1,96], index: 4, kind: input, shape index: {}]
  %s5 = inlined_call_operand.vmem [shape: bf16[2,32,32], index: 5, kind: input, shape index: {}]
  %s6 = inlined_call_operand.vmem [shape: bf16[2,32,64], index: 6, kind: input, shape index: {}]
  %s7 = inlined_call_operand.vmem [shape: f32[2,1,64], index: 7, kind: input, shape index: {}]
  %s8 = inlined_call_operand.vmem [shape: bf16[2,64,32], index: 8, kind: input, shape index: {}]
  %s9 = inlined_call_operand.vmem [shape: f32[2,6,32], index: 9, kind: input, shape index: {}]
  %s10 = inlined_call_operand.vmem [shape: bf16[32,32], index: 10, kind: input, shape index: {}]
  %s11 = inlined_call_operand.vmem [shape: f32[1,32], index: 11, kind: input, shape index: {}]
  %s12 = inlined_call_operand.vmem [shape: bf16[32,128], index: 12, kind: input, shape index: {}]
  %s13 = inlined_call_operand.vmem [shape: f32[1,128], index: 13, kind: input, shape index: {}]
  %s14 = inlined_call_operand.hbm [shape: f32[2,128], index: 14, kind: output, shape index: {}]
  %s15 = sld [smem:[#allocation0]]
  $region97: #{bert_sentiment_forward.1} parent=0
    _
  %s17 = ssub.s32 1, %s15
  %s18 = scalar_select 0, %s17, %s15
  $region1: #{bert_sentiment_forward.1} parent=0
    #allocation3 [shape = 'u8[1024]{0}', space=vmem, size = 0x400, scoped, tag = 'output window, operand 0, single buffered']
    #allocation4 [shape = 's32[2]{0}', space=sflag, size = 0x8, scoped, tag = 'scoped memory for bert_sentiment_forward.1']
    %19 = vsyncpa [#allocation4], 0
    loop: start=0, step=1, limit=4
    $region2: #{bert_sentiment_forward.1} parent=1 // loop_pre_header
      _
    $region3: #{bert_sentiment_forward.1} parent=1 // loop_header
      %s21 = sphi 0, %s25
      %p22 = scmp.ge.s32.totalorder %s21, 4
      %s29 = sphi 0, %s29
      %s31 = sphi 0, %s29
      %s32 = sphi 0, %s31
      %s46 = sphi 0, %s32
      %s50 = sphi 0, %s50
      %s52 = sphi 0, %s50
      %s53 = sphi 0, %s52
      %s67 = sphi 0, %s53
      %s71 = sphi 0, %s71
      %s73 = sphi 0, %s71
      %s74 = sphi 0, %s73
      %s88 = sphi 0, %s74
      %s94 = sphi 0, %s96
      %s97 = sphi 0, %s94
      %s98 = sphi 0, %s97
      %s114 = sphi 0, %s98
      %s120 = sphi 0, %s122
      %s123 = sphi 0, %s120
      %s124 = sphi 0, %s123
      %s140 = sphi 0, %s124
      %s146 = sphi 0, %s148
      %s149 = sphi 0, %s146
      %s150 = sphi 0, %s149
      %s166 = sphi 0, %s150
      %s172 = sphi 0, %s174
      %s175 = sphi 0, %s172
      %s176 = sphi 0, %s175
      %s192 = sphi 0, %s176
      %s198 = sphi 0, %s200
      %s201 = sphi 0, %s198
      %s202 = sphi 0, %s201
      %s218 = sphi 0, %s202
      %s224 = sphi 0, %s226
      %s227 = sphi 0, %s224
      %s228 = sphi 0, %s227
      %s244 = sphi 0, %s228
      %s250 = sphi 0, %s252
      %s253 = sphi 0, %s250
      %s254 = sphi 0, %s253
      %s270 = sphi 0, %s254
      %s274 = sphi 0, %s274
      %s276 = sphi 0, %s274
      %s277 = sphi 0, %s276
      %s291 = sphi 0, %s277
      %s295 = sphi 0, %s295
      %s297 = sphi 0, %s295
      %s298 = sphi 0, %s297
      %s312 = sphi 0, %s298
      %s316 = sphi 0, %s316
      %s318 = sphi 0, %s316
      %s319 = sphi 0, %s318
      %s333 = sphi 0, %s319
      %s337 = sphi 0, %s337
      %s339 = sphi 0, %s337
      %s340 = sphi 0, %s339
      %s354 = sphi 0, %s340
      %s358 = sphi 0, %s358
      %s360 = sphi 0, %s358
      %s361 = sphi 0, %s360
      %s375 = sphi 0, %s361
    $region4: #{bert_sentiment_forward.1} parent=1 // loop_header_branch
      %24 = sbr.rel (%p22) target = $region8
    $region5: #{bert_sentiment_forward.1} parent=1 // loop_body
      %s26 = ssub.s32 %s21, 1
      %s27 = ssub.s32 %s21, 2
      %s28 = sadd.s32 %s21, 1
      %s30 = sadd.s32 %s29, 1
      %p33 = scmp.eq.s32.totalorder %s21, 1
      %p34 = scmp.ne.s32.totalorder %s29, %s31
      %p35 = scmp.eq.s32.totalorder %s21, 0
      %p36 = por %p34, %p35
      %p37 = scmp.ne.s32.totalorder %s29, %s31
      %p38 = scmp.eq.s32.totalorder %s26, 1
      %p39 = por %p37, %p38
      %p40 = scmp.ne.s32.totalorder %s31, %s32
      %p41 = scmp.eq.s32.totalorder %s26, 0
      %p42 = por %p40, %p41
      %p43 = scmp.ne.s32.totalorder %s31, %s32
      %p44 = scmp.eq.s32.totalorder %s27, 1
      %p45 = por %p43, %p44
      %p47 = scmp.ne.s32.totalorder %s32, %s46
      %p48 = scmp.eq.s32.totalorder %s27, 0
      %p49 = por %p47, %p48
      %s51 = sadd.s32 %s50, 1
      %p54 = scmp.eq.s32.totalorder %s21, 1
      %p55 = scmp.ne.s32.totalorder %s50, %s52
      %p56 = scmp.eq.s32.totalorder %s21, 0
      %p57 = por %p55, %p56
      %p58 = scmp.ne.s32.totalorder %s50, %s52
      %p59 = scmp.eq.s32.totalorder %s26, 1
      %p60 = por %p58, %p59
      %p61 = scmp.ne.s32.totalorder %s52, %s53
      %p62 = scmp.eq.s32.totalorder %s26, 0
      %p63 = por %p61, %p62
      %p64 = scmp.ne.s32.totalorder %s52, %s53
      %p65 = scmp.eq.s32.totalorder %s27, 1
      %p66 = por %p64, %p65
      %p68 = scmp.ne.s32.totalorder %s53, %s67
      %p69 = scmp.eq.s32.totalorder %s27, 0
      %p70 = por %p68, %p69
      %s72 = sadd.s32 %s71, 1
      %p75 = scmp.eq.s32.totalorder %s21, 1
      %p76 = scmp.ne.s32.totalorder %s71, %s73
      %p77 = scmp.eq.s32.totalorder %s21, 0
      %p78 = por %p76, %p77
      %p79 = scmp.ne.s32.totalorder %s71, %s73
      %p80 = scmp.eq.s32.totalorder %s26, 1
      %p81 = por %p79, %p80
      %p82 = scmp.ne.s32.totalorder %s73, %s74
      %p83 = scmp.eq.s32.totalorder %s26, 0
      %p84 = por %p82, %p83
      %p85 = scmp.ne.s32.totalorder %s73, %s74
      %p86 = scmp.eq.s32.totalorder %s27, 1
      %p87 = por %p85, %p86
      %p89 = scmp.ne.s32.totalorder %s74, %s88
      %p90 = scmp.eq.s32.totalorder %s27, 0
      %p91 = por %p89, %p90
      %s92 = ssub.s32 %s21, %s28
      %p93 = scmp.eq.s32.totalorder %s92, 0
      %s95 = sadd.s32 %s94, 1
      %s96 = scalar_select %p93, %s94, %s95
      %p99 = pneg %p93
      %p100 = scmp.eq.s32.totalorder %s21, 1
      %p101 = por %p99, %p100
      %p102 = scmp.ne.s32.totalorder %s94, %s97
      %p103 = scmp.eq.s32.totalorder %s21, 0
      %p104 = por %p102, %p103
      %p105 = scmp.ne.s32.totalorder %s94, %s97
      %p106 = scmp.eq.s32.totalorder %s26, 1
      %p107 = por %p105, %p106
      %p108 = scmp.ne.s32.totalorder %s97, %s98
      %p109 = scmp.eq.s32.totalorder %s26, 0
      %p110 = por %p108, %p109
      %p111 = scmp.ne.s32.totalorder %s97, %s98
      %p112 = scmp.eq.s32.totalorder %s27, 1
      %p113 = por %p111, %p112
      %p115 = scmp.ne.s32.totalorder %s98, %s114
      %p116 = scmp.eq.s32.totalorder %s27, 0
      %p117 = por %p115, %p116
      %s118 = ssub.s32 %s21, %s28
      %p119 = scmp.eq.s32.totalorder %s118, 0
      %s121 = sadd.s32 %s120, 1
      %s122 = scalar_select %p119, %s120, %s121
      %p125 = pneg %p119
      %p126 = scmp.eq.s32.totalorder %s21, 1
      %p127 = por %p125, %p126
      %p128 = scmp.ne.s32.totalorder %s120, %s123
      %p129 = scmp.eq.s32.totalorder %s21, 0
      %p130 = por %p128, %p129
      %p131 = scmp.ne.s32.totalorder %s120, %s123
      %p132 = scmp.eq.s32.totalorder %s26, 1
      %p133 = por %p131, %p132
      %p134 = scmp.ne.s32.totalorder %s123, %s124
      %p135 = scmp.eq.s32.totalorder %s26, 0
      %p136 = por %p134, %p135
      %p137 = scmp.ne.s32.totalorder %s123, %s124
      %p138 = scmp.eq.s32.totalorder %s27, 1
      %p139 = por %p137, %p138
      %p141 = scmp.ne.s32.totalorder %s124, %s140
      %p142 = scmp.eq.s32.totalorder %s27, 0
      %p143 = por %p141, %p142
      %s144 = ssub.s32 %s21, %s28
      %p145 = scmp.eq.s32.totalorder %s144, 0
      %s147 = sadd.s32 %s146, 1
      %s148 = scalar_select %p145, %s146, %s147
      %p151 = pneg %p145
      %p152 = scmp.eq.s32.totalorder %s21, 1
      %p153 = por %p151, %p152
      %p154 = scmp.ne.s32.totalorder %s146, %s149
      %p155 = scmp.eq.s32.totalorder %s21, 0
      %p156 = por %p154, %p155
      %p157 = scmp.ne.s32.totalorder %s146, %s149
      %p158 = scmp.eq.s32.totalorder %s26, 1
      %p159 = por %p157, %p158
      %p160 = scmp.ne.s32.totalorder %s149, %s150
      %p161 = scmp.eq.s32.totalorder %s26, 0
      %p162 = por %p160, %p161
      %p163 = scmp.ne.s32.totalorder %s149, %s150
      %p164 = scmp.eq.s32.totalorder %s27, 1
      %p165 = por %p163, %p164
      %p167 = scmp.ne.s32.totalorder %s150, %s166
      %p168 = scmp.eq.s32.totalorder %s27, 0
      %p169 = por %p167, %p168
      %s170 = ssub.s32 %s21, %s28
      %p171 = scmp.eq.s32.totalorder %s170, 0
      %s173 = sadd.s32 %s172, 1
      %s174 = scalar_select %p171, %s172, %s173
      %p177 = pneg %p171
      %p178 = scmp.eq.s32.totalorder %s21, 1
      %p179 = por %p177, %p178
      %p180 = scmp.ne.s32.totalorder %s172, %s175
      %p181 = scmp.eq.s32.totalorder %s21, 0
      %p182 = por %p180, %p181
      %p183 = scmp.ne.s32.totalorder %s172, %s175
      %p184 = scmp.eq.s32.totalorder %s26, 1
      %p185 = por %p183, %p184
      %p186 = scmp.ne.s32.totalorder %s175, %s176
      %p187 = scmp.eq.s32.totalorder %s26, 0
      %p188 = por %p186, %p187
      %p189 = scmp.ne.s32.totalorder %s175, %s176
      %p190 = scmp.eq.s32.totalorder %s27, 1
      %p191 = por %p189, %p190
      %p193 = scmp.ne.s32.totalorder %s176, %s192
      %p194 = scmp.eq.s32.totalorder %s27, 0
      %p195 = por %p193, %p194
      %s196 = ssub.s32 %s21, %s28
      %p197 = scmp.eq.s32.totalorder %s196, 0
      %s199 = sadd.s32 %s198, 1
      %s200 = scalar_select %p197, %s198, %s199
      %p203 = pneg %p197
      %p204 = scmp.eq.s32.totalorder %s21, 1
      %p205 = por %p203, %p204
      %p206 = scmp.ne.s32.totalorder %s198, %s201
      %p207 = scmp.eq.s32.totalorder %s21, 0
      %p208 = por %p206, %p207
      %p209 = scmp.ne.s32.totalorder %s198, %s201
      %p210 = scmp.eq.s32.totalorder %s26, 1
      %p211 = por %p209, %p210
      %p212 = scmp.ne.s32.totalorder %s201, %s202
      %p213 = scmp.eq.s32.totalorder %s26, 0
      %p214 = por %p212, %p213
      %p215 = scmp.ne.s32.totalorder %s201, %s202
      %p216 = scmp.eq.s32.totalorder %s27, 1
      %p217 = por %p215, %p216
      %p219 = scmp.ne.s32.totalorder %s202, %s218
      %p220 = scmp.eq.s32.totalorder %s27, 0
      %p221 = por %p219, %p220
      %s222 = ssub.s32 %s21, %s28
      %p223 = scmp.eq.s32.totalorder %s222, 0
      %s225 = sadd.s32 %s224, 1
      %s226 = scalar_select %p223, %s224, %s225
      %p229 = pneg %p223
      %p230 = scmp.eq.s32.totalorder %s21, 1
      %p231 = por %p229, %p230
      %p232 = scmp.ne.s32.totalorder %s224, %s227
      %p233 = scmp.eq.s32.totalorder %s21, 0
      %p234 = por %p232, %p233
      %p235 = scmp.ne.s32.totalorder %s224, %s227
      %p236 = scmp.eq.s32.totalorder %s26, 1
      %p237 = por %p235, %p236
      %p238 = scmp.ne.s32.totalorder %s227, %s228
      %p239 = scmp.eq.s32.totalorder %s26, 0
      %p240 = por %p238, %p239
      %p241 = scmp.ne.s32.totalorder %s227, %s228
      %p242 = scmp.eq.s32.totalorder %s27, 1
      %p243 = por %p241, %p242
      %p245 = scmp.ne.s32.totalorder %s228, %s244
      %p246 = scmp.eq.s32.totalorder %s27, 0
      %p247 = por %p245, %p246
      %s248 = ssub.s32 %s21, %s28
      %p249 = scmp.eq.s32.totalorder %s248, 0
      %s251 = sadd.s32 %s250, 1
      %s252 = scalar_select %p249, %s250, %s251
      %p255 = pneg %p249
      %p256 = scmp.eq.s32.totalorder %s21, 1
      %p257 = por %p255, %p256
      %p258 = scmp.ne.s32.totalorder %s250, %s253
      %p259 = scmp.eq.s32.totalorder %s21, 0
      %p260 = por %p258, %p259
      %p261 = scmp.ne.s32.totalorder %s250, %s253
      %p262 = scmp.eq.s32.totalorder %s26, 1
      %p263 = por %p261, %p262
      %p264 = scmp.ne.s32.totalorder %s253, %s254
      %p265 = scmp.eq.s32.totalorder %s26, 0
      %p266 = por %p264, %p265
      %p267 = scmp.ne.s32.totalorder %s253, %s254
      %p268 = scmp.eq.s32.totalorder %s27, 1
      %p269 = por %p267, %p268
      %p271 = scmp.ne.s32.totalorder %s254, %s270
      %p272 = scmp.eq.s32.totalorder %s27, 0
      %p273 = por %p271, %p272
      %s275 = sadd.s32 %s274, 1
      %p278 = scmp.eq.s32.totalorder %s21, 1
      %p279 = scmp.ne.s32.totalorder %s274, %s276
      %p280 = scmp.eq.s32.totalorder %s21, 0
      %p281 = por %p279, %p280
      %p282 = scmp.ne.s32.totalorder %s274, %s276
      %p283 = scmp.eq.s32.totalorder %s26, 1
      %p284 = por %p282, %p283
      %p285 = scmp.ne.s32.totalorder %s276, %s277
      %p286 = scmp.eq.s32.totalorder %s26, 0
      %p287 = por %p285, %p286
      %p288 = scmp.ne.s32.totalorder %s276, %s277
      %p289 = scmp.eq.s32.totalorder %s27, 1
      %p290 = por %p288, %p289
      %p292 = scmp.ne.s32.totalorder %s277, %s291
      %p293 = scmp.eq.s32.totalorder %s27, 0
      %p294 = por %p292, %p293
      %s296 = sadd.s32 %s295, 1
      %p299 = scmp.eq.s32.totalorder %s21, 1
      %p300 = scmp.ne.s32.totalorder %s295, %s297
      %p301 = scmp.eq.s32.totalorder %s21, 0
      %p302 = por %p300, %p301
      %p303 = scmp.ne.s32.totalorder %s295, %s297
      %p304 = scmp.eq.s32.totalorder %s26, 1
      %p305 = por %p303, %p304
      %p306 = scmp.ne.s32.totalorder %s297, %s298
      %p307 = scmp.eq.s32.totalorder %s26, 0
      %p308 = por %p306, %p307
      %p309 = scmp.ne.s32.totalorder %s297, %s298
      %p310 = scmp.eq.s32.totalorder %s27, 1
      %p311 = por %p309, %p310
      %p313 = scmp.ne.s32.totalorder %s298, %s312
      %p314 = scmp.eq.s32.totalorder %s27, 0
      %p315 = por %p313, %p314
      %s317 = sadd.s32 %s316, 1
      %p320 = scmp.eq.s32.totalorder %s21, 1
      %p321 = scmp.ne.s32.totalorder %s316, %s318
      %p322 = scmp.eq.s32.totalorder %s21, 0
      %p323 = por %p321, %p322
      %p324 = scmp.ne.s32.totalorder %s316, %s318
      %p325 = scmp.eq.s32.totalorder %s26, 1
      %p326 = por %p324, %p325
      %p327 = scmp.ne.s32.totalorder %s318, %s319
      %p328 = scmp.eq.s32.totalorder %s26, 0
      %p329 = por %p327, %p328
      %p330 = scmp.ne.s32.totalorder %s318, %s319
      %p331 = scmp.eq.s32.totalorder %s27, 1
      %p332 = por %p330, %p331
      %p334 = scmp.ne.s32.totalorder %s319, %s333
      %p335 = scmp.eq.s32.totalorder %s27, 0
      %p336 = por %p334, %p335
      %s338 = sadd.s32 %s337, 1
      %p341 = scmp.eq.s32.totalorder %s21, 1
      %p342 = scmp.ne.s32.totalorder %s337, %s339
      %p343 = scmp.eq.s32.totalorder %s21, 0
      %p344 = por %p342, %p343
      %p345 = scmp.ne.s32.totalorder %s337, %s339
      %p346 = scmp.eq.s32.totalorder %s26, 1
      %p347 = por %p345, %p346
      %p348 = scmp.ne.s32.totalorder %s339, %s340
      %p349 = scmp.eq.s32.totalorder %s26, 0
      %p350 = por %p348, %p349
      %p351 = scmp.ne.s32.totalorder %s339, %s340
      %p352 = scmp.eq.s32.totalorder %s27, 1
      %p353 = por %p351, %p352
      %p355 = scmp.ne.s32.totalorder %s340, %s354
      %p356 = scmp.eq.s32.totalorder %s27, 0
      %p357 = por %p355, %p356
      %s359 = sadd.s32 %s358, 1
      %p362 = scmp.eq.s32.totalorder %s21, 1
      %p363 = scmp.ne.s32.totalorder %s358, %s360
      %p364 = scmp.eq.s32.totalorder %s21, 0
      %p365 = por %p363, %p364
      %p366 = scmp.ne.s32.totalorder %s358, %s360
      %p367 = scmp.eq.s32.totalorder %s26, 1
      %p368 = por %p366, %p367
      %p369 = scmp.ne.s32.totalorder %s360, %s361
      %p370 = scmp.eq.s32.totalorder %s26, 0
      %p371 = por %p369, %p370
      %p372 = scmp.ne.s32.totalorder %s360, %s361
      %p373 = scmp.eq.s32.totalorder %s27, 1
      %p374 = por %p372, %p373
      %p376 = scmp.ne.s32.totalorder %s361, %s375
      %p377 = scmp.eq.s32.totalorder %s27, 0
      %p378 = por %p376, %p377
      %p379 = scmp.le.s32.totalorder 1, %s21
      %p380 = scmp.lt.s32.totalorder %s21, 3
      %p381 = pnand %p379, %p380
      %p382 = pneg %p381
      // Predicated region
      $region9: #{bert_sentiment_forward.1} parent=5 // pred_check
        _
      $region10: #{bert_sentiment_forward.1} parent=5 // pred_check_branch
        %384 = sbr.rel (%p381) target = $region12
      $region11: #{bert_sentiment_forward.1} parent=5 // pred_region
        %s385 = ssub.s32 %s21, 1
        // Predicated region
        $region13: #{bert_sentiment_forward.1} parent=11 // pred_check
          %p386 = pneg %p42
        $region14: #{bert_sentiment_forward.1} parent=11 // pred_check_branch
          %388 = sbr.rel (%p386) target = $region16
        $region15: #{bert_sentiment_forward.1} parent=11 // pred_region
          _
        $region16: #{bert_sentiment_forward.1} parent=11 // pred_fallthru
          _
        // Predicated region
        $region17: #{bert_sentiment_forward.1} parent=11 // pred_check
          %p389 = pneg %p63
        $region18: #{bert_sentiment_forward.1} parent=11 // pred_check_branch
          %391 = sbr.rel (%p389) target = $region20
        $region19: #{bert_sentiment_forward.1} parent=11 // pred_region
          _
        $region20: #{bert_sentiment_forward.1} parent=11 // pred_fallthru
          _
        // Predicated region
        $region21: #{bert_sentiment_forward.1} parent=11 // pred_check
          %p392 = pneg %p84
        $region22: #{bert_sentiment_forward.1} parent=11 // pred_check_branch
          %394 = sbr.rel (%p392) target = $region24
        $region23: #{bert_sentiment_forward.1} parent=11 // pred_region
          _
        $region24: #{bert_sentiment_forward.1} parent=11 // pred_fallthru
          _
        // Predicated region
        $region25: #{bert_sentiment_forward.1} parent=11 // pred_check
          %p395 = pneg %p287
        $region26: #{bert_sentiment_forward.1} parent=11 // pred_check_branch
          %397 = sbr.rel (%p395) target = $region28
        $region27: #{bert_sentiment_forward.1} parent=11 // pred_region
          _
        $region28: #{bert_sentiment_forward.1} parent=11 // pred_fallthru
          _
        // Predicated region
        $region29: #{bert_sentiment_forward.1} parent=11 // pred_check
          %p398 = pneg %p308
        $region30: #{bert_sentiment_forward.1} parent=11 // pred_check_branch
          %400 = sbr.rel (%p398) target = $region32
        $region31: #{bert_sentiment_forward.1} parent=11 // pred_region
          _
        $region32: #{bert_sentiment_forward.1} parent=11 // pred_fallthru
          _
        // Predicated region
        $region33: #{bert_sentiment_forward.1} parent=11 // pred_check
          %p401 = pneg %p329
        $region34: #{bert_sentiment_forward.1} parent=11 // pred_check_branch
          %403 = sbr.rel (%p401) target = $region36
        $region35: #{bert_sentiment_forward.1} parent=11 // pred_region
          _
        $region36: #{bert_sentiment_forward.1} parent=11 // pred_fallthru
          _
        // Predicated region
        $region37: #{bert_sentiment_forward.1} parent=11 // pred_check
          %p404 = pneg %p350
        $region38: #{bert_sentiment_forward.1} parent=11 // pred_check_branch
          %406 = sbr.rel (%p404) target = $region40
        $region39: #{bert_sentiment_forward.1} parent=11 // pred_region
          _
        $region40: #{bert_sentiment_forward.1} parent=11 // pred_fallthru
          _
      $region12: #{bert_sentiment_forward.1} parent=5 // pred_fallthru
        _
      %p407 = scmp.lt.s32.totalorder %s21, 2
      // Predicated region
      $region41: #{bert_sentiment_forward.1} parent=5 // pred_check
        %p408 = pneg %p407
      $region42: #{bert_sentiment_forward.1} parent=5 // pred_check_branch
        %410 = sbr.rel (%p408) target = $region44
      $region43: #{bert_sentiment_forward.1} parent=5 // pred_region
        // Predicated region
        $region45: #{bert_sentiment_forward.1} parent=43 // pred_check
          %p411 = pneg %p104
        $region46: #{bert_sentiment_forward.1} parent=43 // pred_check_branch
          %413 = sbr.rel (%p411) target = $region48
        $region47: #{bert_sentiment_forward.1} parent=43 // pred_region
          %p414 = scmp.lt.s32.totalorder %s21, 1
          %s415 = scalar_select %p414, %s21, 1
          %s416 = smul.addr %s415, 4
          %s417 = smul.addr %s416, 4
          %s418 = scalar_lea.vmem %s3, %s417
        $region48: #{bert_sentiment_forward.1} parent=43 // pred_fallthru
          _
        // Predicated region
        $region49: #{bert_sentiment_forward.1} parent=43 // pred_check
          %p419 = pneg %p130
        $region50: #{bert_sentiment_forward.1} parent=43 // pred_check_branch
          %421 = sbr.rel (%p419) target = $region52
        $region51: #{bert_sentiment_forward.1} parent=43 // pred_region
          %p422 = scmp.lt.s32.totalorder %s21, 1
          %s423 = scalar_select %p422, %s21, 1
          %s424 = scalar_lea.vmem %s4, %s423
        $region52: #{bert_sentiment_forward.1} parent=43 // pred_fallthru
          _
        // Predicated region
        $region53: #{bert_sentiment_forward.1} parent=43 // pred_check
          %p425 = pneg %p156
        $region54: #{bert_sentiment_forward.1} parent=43 // pred_check_branch
          %427 = sbr.rel (%p425) target = $region56
        $region55: #{bert_sentiment_forward.1} parent=43 // pred_region
          %p428 = scmp.lt.s32.totalorder %s21, 1
          %s429 = scalar_select %p428, %s21, 1
          %s430 = smul.addr %s429, 4
          %s431 = smul.addr %s430, 4
          %s432 = scalar_lea.vmem %s5, %s431
        $region56: #{bert_sentiment_forward.1} parent=43 // pred_fallthru
          _
        // Predicated region
        $region57: #{bert_sentiment_forward.1} parent=43 // pred_check
          %p433 = pneg %p182
        $region58: #{bert_sentiment_forward.1} parent=43 // pred_check_branch
          %435 = sbr.rel (%p433) target = $region60
        $region59: #{bert_sentiment_forward.1} parent=43 // pred_region
          %p436 = scmp.lt.s32.totalorder %s21, 1
          %s437 = scalar_select %p436, %s21, 1
          %s438 = smul.addr %s437, 4
          %s439 = smul.addr %s438, 4
          %s440 = scalar_lea.vmem %s6, %s439
        $region60: #{bert_sentiment_forward.1} parent=43 // pred_fallthru
          _
        // Predicated region
        $region61: #{bert_sentiment_forward.1} parent=43 // pred_check
          %p441 = pneg %p208
        $region62: #{bert_sentiment_forward.1} parent=43 // pred_check_branch
          %443 = sbr.rel (%p441) target = $region64
        $region63: #{bert_sentiment_forward.1} parent=43 // pred_region
          %p444 = scmp.lt.s32.totalorder %s21, 1
          %s445 = scalar_select %p444, %s21, 1
          %s446 = scalar_lea.vmem %s7, %s445
        $region64: #{bert_sentiment_forward.1} parent=43 // pred_fallthru
          _
        // Predicated region
        $region65: #{bert_sentiment_forward.1} parent=43 // pred_check
          %p447 = pneg %p234
        $region66: #{bert_sentiment_forward.1} parent=43 // pred_check_branch
          %449 = sbr.rel (%p447) target = $region68
        $region67: #{bert_sentiment_forward.1} parent=43 // pred_region
          %p450 = scmp.lt.s32.totalorder %s21, 1
          %s451 = scalar_select %p450, %s21, 1
          %s452 = smul.addr %s451, 8
          %s453 = smul.addr %s452, 4
          %s454 = scalar_lea.vmem %s8, %s453
        $region68: #{bert_sentiment_forward.1} parent=43 // pred_fallthru
          _
        // Predicated region
        $region69: #{bert_sentiment_forward.1} parent=43 // pred_check
          %p455 = pneg %p260
        $region70: #{bert_sentiment_forward.1} parent=43 // pred_check_branch
          %457 = sbr.rel (%p455) target = $region72
        $region71: #{bert_sentiment_forward.1} parent=43 // pred_region
          %p458 = scmp.lt.s32.totalorder %s21, 1
          %s459 = scalar_select %p458, %s21, 1
          %s460 = smul.addr %s459, 8
          %s461 = scalar_lea.vmem %s9, %s460
        $region72: #{bert_sentiment_forward.1} parent=43 // pred_fallthru
          _
      $region44: #{bert_sentiment_forward.1} parent=5 // pred_fallthru
        _
      %p462 = scmp.le.s32.totalorder 1, %s21
      %p463 = scmp.lt.s32.totalorder %s21, 3
      %p464 = pnand %p462, %p463
      %p465 = pneg %p464
      // Predicated region
      $region73: #{bert_sentiment_forward.1} parent=5 // pred_check
        _
      $region74: #{bert_sentiment_forward.1} parent=5 // pred_check_branch
        %467 = sbr.rel (%p464) target = $region76
      $region75: #{bert_sentiment_forward.1} parent=5 // pred_region
        %s468 = ssub.s32 %s21, 1
        %p469 = pneg %p42
        %p470 = pneg %p39
        %p471 = pneg %p63
        %p472 = pneg %p60
        %p473 = pneg %p84
        %p474 = pneg %p81
        %p475 = scmp.lt.s32.totalorder %s26, 1
        %s476 = scalar_select %p475, %s26, 1
        %s477 = smul.addr %s476, 4
        %s478 = smul.addr %s477, 4
        %s479 = scalar_lea.vmem %s3, %s478
        %p480 = pneg %p110
        %p481 = pneg %p107
        %p482 = scmp.lt.s32.totalorder %s26, 1
        %s483 = scalar_select %p482, %s26, 1
        %s484 = scalar_lea.vmem %s4, %s483
        %p485 = pneg %p136
        %p486 = pneg %p133
        %p487 = scmp.lt.s32.totalorder %s26, 1
        %s488 = scalar_select %p487, %s26, 1
        %s489 = smul.addr %s488, 4
        %s490 = smul.addr %s489, 4
        %s491 = scalar_lea.vmem %s5, %s490
        %p492 = pneg %p162
        %p493 = pneg %p159
        %p494 = scmp.lt.s32.totalorder %s26, 1
        %s495 = scalar_select %p494, %s26, 1
        %s496 = smul.addr %s495, 4
        %s497 = smul.addr %s496, 4
        %s498 = scalar_lea.vmem %s6, %s497
        %p499 = pneg %p188
        %p500 = pneg %p185
        %p501 = scmp.lt.s32.totalorder %s26, 1
        %s502 = scalar_select %p501, %s26, 1
        %s503 = scalar_lea.vmem %s7, %s502
        %p504 = pneg %p214
        %p505 = pneg %p211
        %p506 = scmp.lt.s32.totalorder %s26, 1
        %s507 = scalar_select %p506, %s26, 1
        %s508 = smul.addr %s507, 8
        %s509 = smul.addr %s508, 4
        %s510 = scalar_lea.vmem %s8, %s509
        %p511 = pneg %p240
        %p512 = pneg %p237
        %p513 = scmp.lt.s32.totalorder %s26, 1
        %s514 = scalar_select %p513, %s26, 1
        %s515 = smul.addr %s514, 8
        %s516 = scalar_lea.vmem %s9, %s515
        %p517 = pneg %p266
        %p518 = pneg %p263
        %p519 = pneg %p287
        %p520 = pneg %p284
        %p521 = pneg %p308
        %p522 = pneg %p305
        %p523 = pneg %p329
        %p524 = pneg %p326
        %p525 = pneg %p350
        %p526 = pneg %p347
        %p527 = pneg %p371
        %p528 = pneg %p368
        %p529 = scmp.lt.s32.totalorder %s26, 1
        %s530 = scalar_select %p529, %s26, 1
        %s531 = smul.addr %s530, 4
        %s532 = smul.addr %s531, 4
        %s533 = scalar_lea.vmem %s3, %s532
        %p534 = scmp.lt.s32.totalorder %s26, 1
        %s535 = scalar_select %p534, %s26, 1
        %s536 = scalar_lea.vmem %s4, %s535
        %p537 = scmp.lt.s32.totalorder %s26, 1
        %s538 = scalar_select %p537, %s26, 1
        %s539 = smul.addr %s538, 4
        %s540 = smul.addr %s539, 4
        %s541 = scalar_lea.vmem %s5, %s540
        %p542 = scmp.lt.s32.totalorder %s26, 1
        %s543 = scalar_select %p542, %s26, 1
        %s544 = smul.addr %s543, 4
        %s545 = smul.addr %s544, 4
        %s546 = scalar_lea.vmem %s6, %s545
        %p547 = scmp.lt.s32.totalorder %s26, 1
        %s548 = scalar_select %p547, %s26, 1
        %s549 = scalar_lea.vmem %s7, %s548
        %p550 = scmp.lt.s32.totalorder %s26, 1
        %s551 = scalar_select %p550, %s26, 1
        %s552 = smul.addr %s551, 8
        %s553 = smul.addr %s552, 4
        %s554 = scalar_lea.vmem %s8, %s553
        %p555 = scmp.lt.s32.totalorder %s26, 1
        %s556 = scalar_select %p555, %s26, 1
        %s557 = smul.addr %s556, 8
        %s558 = scalar_lea.vmem %s9, %s557
        %p560 = scmp.eq.s32.totalorder %s26, 0
        // Predicated region
        $region77: #{bert_sentiment_forward.1} parent=75 // pred_check
          %p561 = pneg %p560
        $region78: #{bert_sentiment_forward.1} parent=75 // pred_check_branch
          %563 = sbr.rel (%p561) target = $region80
        $region79: #{bert_sentiment_forward.1} parent=75 // pred_region
          %v564 = vld [vmem:[%s0] sm:$0xff]
          %v565 = vld [vmem:[%s0 + $0x8] sm:$0xff]
          %v566 = vld [vmem:[%s2] sm:$0x1]
          %v567 = vld [vmem:[%s2 + $0x1] sm:$0x1]
          %vm568 = vcmask 261120
          %v569 = vsel %vm568, %v564, 0.0
          %570 = vadd.xlane.f32.xlu0 %v569
          %v571 = vpop.xlane.xlu0 %570
          %v572 = vsel %vm568, %v565, 0.0
          %573 = vadd.xlane.f32.xlu0 %v572
          %v574 = vpop.xlane.xlu0 %573
          %v575 = vrcp.pop 32.0
          %v576 = vmul.f32 %v571, %v575
          %v577 = vmul.f32 %v574, %v575
          %v578 = vsub.f32 %v564, %v576
          %v579 = vsub.f32 %v565, %v577
          %v580 = vmul.f32 %v578, %v578
          %v581 = vmul.f32 %v579, %v579
          %v582 = vsel %vm568, %v580, 0.0
          %583 = vadd.xlane.f32.xlu0 %v582
          %v584 = vpop.xlane.xlu0 %583
          %v585 = vsel %vm568, %v581, 0.0
          %586 = vadd.xlane.f32.xlu0 %v585
          %v587 = vpop.xlane.xlu0 %586
          %v588 = vmul.f32 %v584, %v575
          %v589 = vmul.f32 %v587, %v575
          %v590 = vadd.f32 %v588, 1e-12
          %v591 = vadd.f32 %v589, 1e-12
          %v592 = vrsqrt.pop %v590
          %v593 = vrsqrt.pop %v591
          %v594 = vmul.f32 %v578, %v592
          %v595 = vmul.f32 %v579, %v593
          %v596 = vlaneseq
          %v597 = vshrl.u32 %v596, 7
          %v598 = vsub.s32 0, %v597
          %v599 = vrot.slane %v566, %v598
          %v600 = vmul.f32 %v594, %v599
          %v601 = vmul.f32 %v595, %v599
          %v602 = vlaneseq
          %v603 = vshrl.u32 %v602, 7
          %v604 = vsub.s32 0, %v603
          %v605 = vrot.slane %v567, %v604
          %v606 = vadd.f32 %v600, %v605
          %v607 = vadd.f32 %v601, %v605
          %608 = vst.msk [vmem:[#allocation2] sm:$0xff] %vm568, %v606
          %609 = vst.msk [vmem:[#allocation2 + $0x8] sm:$0xff] %vm568, %v607
        $region80: #{bert_sentiment_forward.1} parent=75 // pred_fallthru
          _
        %v610 = vld [vmem:[#allocation2] sm:$0xff]
        %v611 = vld [vmem:[#allocation2 + $0x8] sm:$0xff]
        %v612 = vpack.c.bf16 %v611, %v610
        %v613 = vld [vmem:[%s533] sm:$0xf]
        %v614 = vld [vmem:[%s533 + $0x4] sm:$0xf]
        %v615 = vld [vmem:[%s533 + $0x8] sm:$0xf]
        %v616 = vld [vmem:[%s533 + $0xc] sm:$0xf]
        %v617 = vld [vmem:[%s536] sm:$0x1]
        %v619 = vlaneseq
        %v620 = vshrl.u32 %v619, 7
        %v621 = vsub.s32 0, %v620
        %v622 = vrot.slane %v617, %v621
        %v628 = vunpack.c.l.b16 %v613
        %v629 = vunpack.c.l.b16 %v614
        %v630 = vunpack.c.l.b16 %v615
        %v631 = vunpack.c.l.b16 %v616
        %v632 = vpack.c.b16 %v629, %v628
        %v633 = vpack.c.b16 %v631, %v630
        %vm636 = vcmask 261120
        %v638 = vsel %vm636, %v612, 0
        %640 = vmatprep.subr.bf16.mxu0 0
        %641 = vmatpush1.bf16.msra.mxu0 %v632
        %642 = vmatprep.subr.bf16.mxu0 0
        %643 = vmatpush1.bf16.msra.mxu0 %v633
        %644 = vmatprep.subr.bf16.mxu0 0
        %645 = vmatpush1.bf16.msra.mxu0 0
        %646 = vmatprep.subr.bf16.mxu0 0
        %647 = vmatpush1.bf16.msra.mxu0 0
        %648 = vmatprep.subr.bf16.mxu0 0
        %649 = vmatpush1.bf16.msra.mxu0 0
        %650 = vmatprep.subr.bf16.mxu0 0
        %651 = vmatpush1.bf16.msra.mxu0 0
        %652 = vmatprep.subr.bf16.mxu0 0
        %653 = vmatpush1.bf16.msra.mxu0 0
        %654 = vmatprep.subr.bf16.mxu0 0
        %655 = vmatpush1.bf16.msra.mxu0 0
        %656 = vmatprep.subr.bf16.mxu0 0
        %657 = vmatpush1.bf16.msra.mxu0 0
        %658 = vmatprep.subr.bf16.mxu0 0
        %659 = vmatpush1.bf16.msra.mxu0 0
        %660 = vmatprep.subr.bf16.mxu0 0
        %661 = vmatpush1.bf16.msra.mxu0 0
        %662 = vmatprep.subr.bf16.mxu0 0
        %663 = vmatpush1.bf16.msra.mxu0 0
        %664 = vmatprep.subr.bf16.mxu0 0
        %665 = vmatpush1.bf16.msra.mxu0 0
        %666 = vmatprep.subr.bf16.mxu0 0
        %667 = vmatpush1.bf16.msra.mxu0 0
        %668 = vmatprep.subr.bf16.mxu0 0
        %669 = vmatpush1.bf16.msra.mxu0 0
        %670 = vmatprep.subr.bf16.mxu0 0
        %671 = vmatpush1.bf16.msra.mxu0 0
        %672 = vmatprep.mubr.bf16.mxu0 0
        %673 = vmatmul.mubr.bf16.gmra.mrb[0].mxu0 %v638
        %v674 = vpop.f32.mrb[0].mxu0
        %v675 = vadd.f32 %v622, %v674
        %v676 = vpop.f32.mrb[0].mxu0
        %v677 = vpop.f32.mrb[0].mxu0
        %v678 = vadd.f32 %v622, %v677
        %v679 = vpop.f32.mrb[0].mxu0
        %680 = vdwg.mxu0
        %v681 = vpack.c.bf16 %v678, %v675
        %v682 = vld [vmem:[%s1] sm:$0x3]
        %v685 = vunpack.c.l.s4 1966171168
        %v686 = vunpack.c.0.s8 %v685
        %v687 = vlaneseq
        %v688 = vshrl.u32 %v687, 7
        %v689 = vsub.s32 %v686, %v688
        %v690 = vrot.slane %v682, %v689
        %v691 = vcombine.high %v690, %v690
        %v693 = vunpack.c.l.s4 1966171168
        %v694 = vunpack.c.0.s8 %v693
        %v695 = vlaneseq
        %v696 = vshrl.u32 %v695, 7
        %v697 = vsub.s32 %v694, %v696
        %v698 = vrot.slane %v690, %v697
        %v700 = vunpack.c.l.s4 1966171168
        %v701 = vunpack.c.0.s8 %v700
        %v702 = vlaneseq
        %v703 = vshrl.u32 %v702, 7
        %v704 = vsub.s32 %v701, %v703
        %v705 = vrot.slane %v691, %v704
        %v707 = vunpack.c.l.b16 %v681
        %v708 = vunpack.c.h.b16 %v681
        %v709 = vpack.c.b16 %v707, %v707
        %v710 = vpack.c.b16 %v708, %v708
        %711 = vrot.lane.b32.xlu0 %v709, 96
        %v712 = vpop.permute.xlu0 %711
        %vm713 = vcmask 64512
        %v715 = vsel %vm713, %v709, 0
        %v718 = vsel %vm713, %v712, 0
        %720 = vmatprep.subr.bf16.mxu0 0
        %721 = vmatpush1.bf16.xpose.msra.mxu0 %v718
        %722 = vmatprep.subr.bf16.mxu0 0
        %723 = vmatpush1.bf16.xpose.msra.mxu0 0
        %724 = vmatprep.subr.bf16.mxu0 0
        %725 = vmatpush1.bf16.xpose.msra.mxu0 0
        %726 = vmatprep.subr.bf16.mxu0 0
        %727 = vmatpush1.bf16.xpose.msra.mxu0 0
        %728 = vmatprep.subr.bf16.mxu0 0
        %729 = vmatpush1.bf16.xpose.msra.mxu0 0
        %730 = vmatprep.subr.bf16.mxu0 0
        %731 = vmatpush1.bf16.xpose.msra.mxu0 0
        %732 = vmatprep.subr.bf16.mxu0 0
        %733 = vmatpush1.bf16.xpose.msra.mxu0 0
        %734 = vmatprep.subr.bf16.mxu0 0
        %735 = vmatpush1.bf16.xpose.msra.mxu0 0
        %736 = vmatprep.subr.bf16.mxu0 0
        %737 = vmatpush1.bf16.xpose.msra.mxu0 0
        %738 = vmatprep.subr.bf16.mxu0 0
        %739 = vmatpush1.bf16.xpose.msra.mxu0 0
        %740 = vmatprep.subr.bf16.mxu0 0
        %741 = vmatpush1.bf16.xpose.msra.mxu0 0
        %742 = vmatprep.subr.bf16.mxu0 0
        %743 = vmatpush1.bf16.xpose.msra.mxu0 0
        %744 = vmatprep.subr.bf16.mxu0 0
        %745 = vmatpush1.bf16.xpose.msra.mxu0 0
        %746 = vmatprep.subr.bf16.mxu0 0
        %747 = vmatpush1.bf16.xpose.msra.mxu0 0
        %748 = vmatprep.subr.bf16.mxu0 0
        %749 = vmatpush1.bf16.xpose.msra.mxu0 0
        %750 = vmatprep.subr.bf16.mxu0 0
        %751 = vmatpush1.bf16.xpose.msra.mxu0 0
        %752 = vmatprep.mubr.bf16.mxu0 0
        %753 = vmatmul.mubr.bf16.gmra.mrb[0].mxu0 %v715
        %v754 = vpop.f32.mrb[0].mxu0
        %v755 = vadd.f32 0.0, %v754
        %v756 = vpop.f32.mrb[0].mxu0
        %v757 = vpop.f32.mrb[0].mxu0
        %v758 = vpop.f32.mrb[0].mxu0
        %759 = vdwg.mxu0
        %760 = vrot.lane.b32.xlu0 %v710, 96
        %v761 = vpop.permute.xlu0 %760
        %v763 = vsel %vm713, %v710, 0
        %v766 = vsel %vm713, %v761, 0
        %768 = vmatprep.subr.bf16.mxu0 0
        %769 = vmatpush1.bf16.xpose.msra.mxu0 %v766
        %770 = vmatprep.subr.bf16.mxu0 0
        %771 = vmatpush1.bf16.xpose.msra.mxu0 0
        %772 = vmatprep.subr.bf16.mxu0 0
        %773 = vmatpush1.bf16.xpose.msra.mxu0 0
        %774 = vmatprep.subr.bf16.mxu0 0
        %775 = vmatpush1.bf16.xpose.msra.mxu0 0
        %776 = vmatprep.subr.bf16.mxu0 0
        %777 = vmatpush1.bf16.xpose.msra.mxu0 0
        %778 = vmatprep.subr.bf16.mxu0 0
        %779 = vmatpush1.bf16.xpose.msra.mxu0 0
        %780 = vmatprep.subr.bf16.mxu0 0
        %781 = vmatpush1.bf16.xpose.msra.mxu0 0
        %782 = vmatprep.subr.bf16.mxu0 0
        %783 = vmatpush1.bf16.xpose.msra.mxu0 0
        %784 = vmatprep.subr.bf16.mxu0 0
        %785 = vmatpush1.bf16.xpose.msra.mxu0 0
        %786 = vmatprep.subr.bf16.mxu0 0
        %787 = vmatpush1.bf16.xpose.msra.mxu0 0
        %788 = vmatprep.subr.bf16.mxu0 0
        %789 = vmatpush1.bf16.xpose.msra.mxu0 0
        %790 = vmatprep.subr.bf16.mxu0 0
        %791 = vmatpush1.bf16.xpose.msra.mxu0 0
        %792 = vmatprep.subr.bf16.mxu0 0
        %793 = vmatpush1.bf16.xpose.msra.mxu0 0
        %794 = vmatprep.subr.bf16.mxu0 0
        %795 = vmatpush1.bf16.xpose.msra.mxu0 0
        %796 = vmatprep.subr.bf16.mxu0 0
        %797 = vmatpush1.bf16.xpose.msra.mxu0 0
        %798 = vmatprep.subr.bf16.mxu0 0
        %799 = vmatpush1.bf16.xpose.msra.mxu0 0
        %800 = vmatprep.mubr.bf16.mxu0 0
        %801 = vmatmul.mubr.bf16.gmra.mrb[0].mxu0 %v763
        %v802 = vpop.f32.mrb[0].mxu0
        %v803 = vadd.f32 0.0, %v802
        %v804 = vpop.f32.mrb[0].mxu0
        %v805 = vpop.f32.mrb[0].mxu0
        %v806 = vpop.f32.mrb[0].mxu0
        %807 = vdwg.mxu0
        %v808 = vmul.f32 %v755, 0.35355338
        %v809 = vmul.f32 %v803, 0.35355338
        %v810 = vlaneseq
        %v811 = vshrl.u32 %v810, 7
        %v812 = vsub.s32 0, %v811
        %v813 = vrot.slane %v698, %v812
        %v814 = vlaneseq
        %v815 = vshrl.u32 %v814, 7
        %v816 = vsub.s32 0, %v815
        %v817 = vrot.slane %v705, %v816
        %v820 = vadd.f32 %v808, %v813
        %v821 = vadd.f32 %v809, %v817
        %v822 = vsel %vm713, %v820, -inf
        %823 = vmax.xlane.f32.xlu0 %v822
        %v824 = vpop.xlane.xlu0 %823
        %v825 = vsel %vm713, %v821, -inf
        %826 = vmax.xlane.f32.xlu0 %v825
        %v827 = vpop.xlane.xlu0 %826
        %v828 = vsub.f32 %v820, %v824
        %v829 = vsub.f32 %v821, %v827
        %v830 = vmul.f32 %v828, 1.442695
        %v831 = vpow.pop %v830
        %v832 = vmul.f32 %v829, 1.442695
        %v833 = vpow.pop %v832
        %v834 = vsel %vm713, %v831, 0.0
        %835 = vadd.xlane.f32.xlu0 %v834
        %v836 = vpop.xlane.xlu0 %835
        %v837 = vsel %vm713, %v833, 0.0
        %838 = vadd.xlane.f32.xlu0 %v837
        %v839 = vpop.xlane.xlu0 %838
        %v840 = vrcp.pop %v836
        %v841 = vrcp.pop %v839
        %v842 = vmul.f32 %v831, %v840
        %v843 = vmul.f32 %v833, %v841
        %v844 = vpack.c.bf16 %v842, %v842
        %v845 = vpack.c.bf16 %v843, %v843
        %846 = vrot.lane.b32.xlu0 %v709, 64
        %v847 = vpop.permute.xlu0 %846
        %v849 = vsel %vm713, %v844, 0
        %vm851 = vcmask 1043456
        %v853 = vsel %vm851, %v847, 0
        %855 = vmatprep.subr.bf16.mxu0 0
        %856 = vmatpush1.bf16.msra.mxu0 %v853
        %857 = vmatprep.subr.bf16.mxu0 0
        %858 = vmatpush1.bf16.msra.mxu0 0
        %859 = vmatprep.subr.bf16.mxu0 0
        %860 = vmatpush1.bf16.msra.mxu0 0
        %861 = vmatprep.subr.bf16.mxu0 0
        %862 = vmatpush1.bf16.msra.mxu0 0
        %863 = vmatprep.subr.bf16.mxu0 0
        %864 = vmatpush1.bf16.msra.mxu0 0
        %865 = vmatprep.subr.bf16.mxu0 0
        %866 = vmatpush1.bf16.msra.mxu0 0
        %867 = vmatprep.subr.bf16.mxu0 0
        %868 = vmatpush1.bf16.msra.mxu0 0
        %869 = vmatprep.subr.bf16.mxu0 0
        %870 = vmatpush1.bf16.msra.mxu0 0
        %871 = vmatprep.subr.bf16.mxu0 0
        %872 = vmatpush1.bf16.msra.mxu0 0
        %873 = vmatprep.subr.bf16.mxu0 0
        %874 = vmatpush1.bf16.msra.mxu0 0
        %875 = vmatprep.subr.bf16.mxu0 0
        %876 = vmatpush1.bf16.msra.mxu0 0
        %877 = vmatprep.subr.bf16.mxu0 0
        %878 = vmatpush1.bf16.msra.mxu0 0
        %879 = vmatprep.subr.bf16.mxu0 0
        %880 = vmatpush1.bf16.msra.mxu0 0
        %881 = vmatprep.subr.bf16.mxu0 0
        %882 = vmatpush1.bf16.msra.mxu0 0
        %883 = vmatprep.subr.bf16.mxu0 0
        %884 = vmatpush1.bf16.msra.mxu0 0
        %885 = vmatprep.subr.bf16.mxu0 0
        %886 = vmatpush1.bf16.msra.mxu0 0
        %887 = vmatprep.mubr.bf16.mxu0 0
        %888 = vmatmul.mubr.bf16.gmra.mrb[0].mxu0 %v849
        %v889 = vpop.f32.mrb[0].mxu0
        %v890 = vadd.f32 0.0, %v889
        %v891 = vpop.f32.mrb[0].mxu0
        %v892 = vpop.f32.mrb[0].mxu0
        %v893 = vpop.f32.mrb[0].mxu0
        %894 = vdwg.mxu0
        %895 = vrot.lane.b32.xlu0 %v710, 64
        %v896 = vpop.permute.xlu0 %895
        %v898 = vsel %vm713, %v845, 0
        %v901 = vsel %vm851, %v896, 0
        %903 = vmatprep.subr.bf16.mxu0 0
        %904 = vmatpush1.bf16.msra.mxu0 %v901
        %905 = vmatprep.subr.bf16.mxu0 0
        %906 = vmatpush1.bf16.msra.mxu0 0
        %907 = vmatprep.subr.bf16.mxu0 0
        %908 = vmatpush1.bf16.msra.mxu0 0
        %909 = vmatprep.subr.bf16.mxu0 0
        %910 = vmatpush1.bf16.msra.mxu0 0
        %911 = vmatprep.subr.bf16.mxu0 0
        %912 = vmatpush1.bf16.msra.mxu0 0
        %913 = vmatprep.subr.bf16.mxu0 0
        %914 = vmatpush1.bf16.msra.mxu0 0
        %915 = vmatprep.subr.bf16.mxu0 0
        %916 = vmatpush1.bf16.msra.mxu0 0
        %917 = vmatprep.subr.bf16.mxu0 0
        %918 = vmatpush1.bf16.msra.mxu0 0
        %919 = vmatprep.subr.bf16.mxu0 0
        %920 = vmatpush1.bf16.msra.mxu0 0
        %921 = vmatprep.subr.bf16.mxu0 0
        %922 = vmatpush1.bf16.msra.mxu0 0
        %923 = vmatprep.subr.bf16.mxu0 0
        %924 = vmatpush1.bf16.msra.mxu0 0
        %925 = vmatprep.subr.bf16.mxu0 0
        %926 = vmatpush1.bf16.msra.mxu0 0
        %927 = vmatprep.subr.bf16.mxu0 0
        %928 = vmatpush1.bf16.msra.mxu0 0
        %929 = vmatprep.subr.bf16.mxu0 0
        %930 = vmatpush1.bf16.msra.mxu0 0
        %931 = vmatprep.subr.bf16.mxu0 0
        %932 = vmatpush1.bf16.msra.mxu0 0
        %933 = vmatprep.subr.bf16.mxu0 0
        %934 = vmatpush1.bf16.msra.mxu0 0
        %935 = vmatprep.mubr.bf16.mxu0 0
        %936 = vmatmul.mubr.bf16.gmra.mrb[0].mxu0 %v898
        %v937 = vpop.f32.mrb[0].mxu0
        %v938 = vadd.f32 0.0, %v937
        %v939 = vpop.f32.mrb[0].mxu0
        %v940 = vpop.f32.mrb[0].mxu0
        %v941 = vpop.f32.mrb[0].mxu0
        %942 = vdwg.mxu0
        %943 = vrot.lane.b32.xlu0 %v709, 120
        %v944 = vpop.permute.xlu0 %943
        %945 = vrot.lane.b32.xlu0 %v709, 88
        %v946 = vpop.permute.xlu0 %945
        %v948 = vsel %vm713, %v944, 0
        %v951 = vsel %vm713, %v946, 0
        %953 = vmatprep.subr.bf16.mxu0 0
        %954 = vmatpush1.bf16.xpose.msra.mxu0 %v951
        %955 = vmatprep.subr.bf16.mxu0 0
        %956 = vmatpush1.bf16.xpose.msra.mxu0 0
        %957 = vmatprep.subr.bf16.mxu0 0
        %958 = vmatpush1.bf16.xpose.msra.mxu0 0
        %959 = vmatprep.subr.bf16.mxu0 0
        %960 = vmatpush1.bf16.xpose.msra.mxu0 0
        %961 = vmatprep.subr.bf16.mxu0 0
        %962 = vmatpush1.bf16.xpose.msra.mxu0 0
        %963 = vmatprep.subr.bf16.mxu0 0
        %964 = vmatpush1.bf16.xpose.msra.mxu0 0
        %965 = vmatprep.subr.bf16.mxu0 0
        %966 = vmatpush1.bf16.xpose.msra.mxu0 0
        %967 = vmatprep.subr.bf16.mxu0 0
        %968 = vmatpush1.bf16.xpose.msra.mxu0 0
        %969 = vmatprep.subr.bf16.mxu0 0
        %970 = vmatpush1.bf16.xpose.msra.mxu0 0
        %971 = vmatprep.subr.bf16.mxu0 0
        %972 = vmatpush1.bf16.xpose.msra.mxu0 0
        %973 = vmatprep.subr.bf16.mxu0 0
        %974 = vmatpush1.bf16.xpose.msra.mxu0 0
        %975 = vmatprep.subr.bf16.mxu0 0
        %976 = vmatpush1.bf16.xpose.msra.mxu0 0
        %977 = vmatprep.subr.bf16.mxu0 0
        %978 = vmatpush1.bf16.xpose.msra.mxu0 0
        %979 = vmatprep.subr.bf16.mxu0 0
        %980 = vmatpush1.bf16.xpose.msra.mxu0 0
        %981 = vmatprep.subr.bf16.mxu0 0
        %982 = vmatpush1.bf16.xpose.msra.mxu0 0
        %983 = vmatprep.subr.bf16.mxu0 0
        %984 = vmatpush1.bf16.xpose.msra.mxu0 0
        %985 = vmatprep.mubr.bf16.mxu0 0
        %986 = vmatmul.mubr.bf16.gmra.mrb[0].mxu0 %v948
        %v987 = vpop.f32.mrb[0].mxu0
        %v988 = vadd.f32 0.0, %v987
        %v989 = vpop.f32.mrb[0].mxu0
        %v990 = vpop.f32.mrb[0].mxu0
        %v991 = vpop.f32.mrb[0].mxu0
        %992 = vdwg.mxu0
        %993 = vrot.lane.b32.xlu0 %v710, 120
        %v994 = vpop.permute.xlu0 %993
        %995 = vrot.lane.b32.xlu0 %v710, 88
        %v996 = vpop.permute.xlu0 %995
        %v998 = vsel %vm713, %v994, 0
        %v1001 = vsel %vm713, %v996, 0
        %1003 = vmatprep.subr.bf16.mxu0 0
        %1004 = vmatpush1.bf16.xpose.msra.mxu0 %v1001
        %1005 = vmatprep.subr.bf16.mxu0 0
        %1006 = vmatpush1.bf16.xpose.msra.mxu0 0
        %1007 = vmatprep.subr.bf16.mxu0 0
        %1008 = vmatpush1.bf16.xpose.msra.mxu0 0
        %1009 = vmatprep.subr.bf16.mxu0 0
        %1010 = vmatpush1.bf16.xpose.msra.mxu0 0
        %1011 = vmatprep.subr.bf16.mxu0 0
        %1012 = vmatpush1.bf16.xpose.msra.mxu0 0
        %1013 = vmatprep.subr.bf16.mxu0 0
        %1014 = vmatpush1.bf16.xpose.msra.mxu0 0
        %1015 = vmatprep.subr.bf16.mxu0 0
        %1016 = vmatpush1.bf16.xpose.msra.mxu0 0
        %1017 = vmatprep.subr.bf16.mxu0 0
        %1018 = vmatpush1.bf16.xpose.msra.mxu0 0
        %1019 = vmatprep.subr.bf16.mxu0 0
        %1020 = vmatpush1.bf16.xpose.msra.mxu0 0
        %1021 = vmatprep.subr.bf16.mxu0 0
        %1022 = vmatpush1.bf16.xpose.msra.mxu0 0
        %1023 = vmatprep.subr.bf16.mxu0 0
        %1024 = vmatpush1.bf16.xpose.msra.mxu0 0
        %1025 = vmatprep.subr.bf16.mxu0 0
        %1026 = vmatpush1.bf16.xpose.msra.mxu0 0
        %1027 = vmatprep.subr.bf16.mxu0 0
        %1028 = vmatpush1.bf16.xpose.msra.mxu0 0
        %1029 = vmatprep.subr.bf16.mxu0 0
        %1030 = vmatpush1.bf16.xpose.msra.mxu0 0
        %1031 = vmatprep.subr.bf16.mxu0 0
        %1032 = vmatpush1.bf16.xpose.msra.mxu0 0
        %1033 = vmatprep.subr.bf16.mxu0 0
        %1034 = vmatpush1.bf16.xpose.msra.mxu0 0
        %1035 = vmatprep.mubr.bf16.mxu0 0
        %1036 = vmatmul.mubr.bf16.gmra.mrb[0].mxu0 %v998
        %v1037 = vpop.f32.mrb[0].mxu0
        %v1038 = vadd.f32 0.0, %v1037
        %v1039 = vpop.f32.mrb[0].mxu0
        %v1040 = vpop.f32.mrb[0].mxu0
        %v1041 = vpop.f32.mrb[0].mxu0
        %1042 = vdwg.mxu0
        %v1043 = vmul.f32 %v988, 0.35355338
        %v1044 = vmul.f32 %v1038, 0.35355338
        %v1045 = vadd.f32 %v1043, %v813
        %v1046 = vadd.f32 %v1044, %v817
        %v1047 = vsel %vm713, %v1045, -inf
        %1048 = vmax.xlane.f32.xlu0 %v1047
        %v1049 = vpop.xlane.xlu0 %1048
        %v1050 = vsel %vm713, %v1046, -inf
        %1051 = vmax.xlane.f32.xlu0 %v1050
        %v1052 = vpop.xlane.xlu0 %1051
        %v1053 = vsub.f32 %v1045, %v1049
        %v1054 = vsub.f32 %v1046, %v1052
        %v1055 = vmul.f32 %v1053, 1.442695
        %v1056 = vpow.pop %v1055
        %v1057 = vmul.f32 %v1054, 1.442695
        %v1058 = vpow.pop %v1057
        %v1059 = vsel %vm713, %v1056, 0.0
        %1060 = vadd.xlane.f32.xlu0 %v1059
        %v1061 = vpop.xlane.xlu0 %1060
        %v1062 = vsel %vm713, %v1058, 0.0
        %1063 = vadd.xlane.f32.xlu0 %v1062
        %v1064 = vpop.xlane.xlu0 %1063
        %v1065 = vrcp.pop %v1061
        %v1066 = vrcp.pop %v1064
        %v1067 = vmul.f32 %v1056, %v1065
        %v1068 = vmul.f32 %v1058, %v1066
        %v1069 = vpack.c.bf16 %v1067, %v1067
        %v1070 = vpack.c.bf16 %v1068, %v1068
        %1071 = vrot.lane.b32.xlu0 %v709, 56
        %v1072 = vpop.permute.xlu0 %1071
        %v1074 = vsel %vm713, %v1069, 0
        %v1077 = vsel %vm851, %v1072, 0
        %1079 = vmatprep.subr.bf16.mxu0 0
        %1080 = vmatpush1.bf16.msra.mxu0 %v1077
        %1081 = vmatprep.subr.bf16.mxu0 0
        %1082 = vmatpush1.bf16.msra.mxu0 0
        %1083 = vmatprep.subr.bf16.mxu0 0
        %1084 = vmatpush1.bf16.msra.mxu0 0
        %1085 = vmatprep.subr.bf16.mxu0 0
        %1086 = vmatpush1.bf16.msra.mxu0 0
        %1087 = vmatprep.subr.bf16.mxu0 0
        %1088 = vmatpush1.bf16.msra.mxu0 0
        %1089 = vmatprep.subr.bf16.mxu0 0
        %1090 = vmatpush1.bf16.msra.mxu0 0
        %1091 = vmatprep.subr.bf16.mxu0 0
        %1092 = vmatpush1.bf16.msra.mxu0 0
        %1093 = vmatprep.subr.bf16.mxu0 0
        %1094 = vmatpush1.bf16.msra.mxu0 0
        %1095 = vmatprep.subr.bf16.mxu0 0
        %1096 = vmatpush1.bf16.msra.mxu0 0
        %1097 = vmatprep.subr.bf16.mxu0 0
        %1098 = vmatpush1.bf16.msra.mxu0 0
        %1099 = vmatprep.subr.bf16.mxu0 0
        %1100 = vmatpush1.bf16.msra.mxu0 0
        %1101 = vmatprep.subr.bf16.mxu0 0
        %1102 = vmatpush1.bf16.msra.mxu0 0
        %1103 = vmatprep.subr.bf16.mxu0 0
        %1104 = vmatpush1.bf16.msra.mxu0 0
        %1105 = vmatprep.subr.bf16.mxu0 0
        %1106 = vmatpush1.bf16.msra.mxu0 0
        %1107 = vmatprep.subr.bf16.mxu0 0
        %1108 = vmatpush1.bf16.msra.mxu0 0
        %1109 = vmatprep.subr.bf16.mxu0 0
        %1110 = vmatpush1.bf16.msra.mxu0 0
        %1111 = vmatprep.mubr.bf16.mxu0 0
        %1112 = vmatmul.mubr.bf16.gmra.mrb[0].mxu0 %v1074
        %v1113 = vpop.f32.mrb[0].mxu0
        %v1114 = vadd.f32 0.0, %v1113
        %v1115 = vpop.f32.mrb[0].mxu0
        %v1116 = vpop.f32.mrb[0].mxu0
        %v1117 = vpop.f32.mrb[0].mxu0
        %1118 = vdwg.mxu0
        %1119 = vrot.lane.b32.xlu0 %v710, 56
        %v1120 = vpop.permute.xlu0 %1119
        %v1122 = vsel %vm713, %v1070, 0
        %v1125 = vsel %vm851, %v1120, 0
        %1127 = vmatprep.subr.bf16.mxu0 0
        %1128 = vmatpush1.bf16.msra.mxu0 %v1125
        %1129 = vmatprep.subr.bf16.mxu0 0
        %1130 = vmatpush1.bf16.msra.mxu0 0
        %1131 = vmatprep.subr.bf16.mxu0 0
        %1132 = vmatpush1.bf16.msra.mxu0 0
        %1133 = vmatprep.subr.bf16.mxu0 0
        %1134 = vmatpush1.bf16.msra.mxu0 0
        %1135 = vmatprep.subr.bf16.mxu0 0
        %1136 = vmatpush1.bf16.msra.mxu0 0
        %1137 = vmatprep.subr.bf16.mxu0 0
        %1138 = vmatpush1.bf16.msra.mxu0 0
        %1139 = vmatprep.subr.bf16.mxu0 0
        %1140 = vmatpush1.bf16.msra.mxu0 0
        %1141 = vmatprep.subr.bf16.mxu0 0
        %1142 = vmatpush1.bf16.msra.mxu0 0
        %1143 = vmatprep.subr.bf16.mxu0 0
        %1144 = vmatpush1.bf16.msra.mxu0 0
        %1145 = vmatprep.subr.bf16.mxu0 0
        %1146 = vmatpush1.bf16.msra.mxu0 0
        %1147 = vmatprep.subr.bf16.mxu0 0
        %1148 = vmatpush1.bf16.msra.mxu0 0
        %1149 = vmatprep.subr.bf16.mxu0 0
        %1150 = vmatpush1.bf16.msra.mxu0 0
        %1151 = vmatprep.subr.bf16.mxu0 0
        %1152 = vmatpush1.bf16.msra.mxu0 0
        %1153 = vmatprep.subr.bf16.mxu0 0
        %1154 = vmatpush1.bf16.msra.mxu0 0
        %1155 = vmatprep.subr.bf16.mxu0 0
        %1156 = vmatpush1.bf16.msra.mxu0 0
        %1157 = vmatprep.subr.bf16.mxu0 0
        %1158 = vmatpush1.bf16.msra.mxu0 0
        %1159 = vmatprep.mubr.bf16.mxu0 0
        %1160 = vmatmul.mubr.bf16.gmra.mrb[0].mxu0 %v1122
        %v1161 = vpop.f32.mrb[0].mxu0
        %v1162 = vadd.f32 0.0, %v1161
        %v1163 = vpop.f32.mrb[0].mxu0
        %v1164 = vpop.f32.mrb[0].mxu0
        %v1165 = vpop.f32.mrb[0].mxu0
        %1166 = vdwg.mxu0
        %1167 = vrot.lane.b32.xlu0 %v709, 112
        %v1168 = vpop.permute.xlu0 %1167
        %1169 = vrot.lane.b32.xlu0 %v709, 80
        %v1170 = vpop.permute.xlu0 %1169
        %v1172 = vsel %vm713, %v1168, 0
        %v1175 = vsel %vm713, %v1170, 0
        %1177 = vmatprep.subr.bf16.mxu0 0
        %1178 = vmatpush1.bf16.xpose.msra.mxu0 %v1175
        %1179 = vmatprep.subr.bf16.mxu0 0
        %1180 = vmatpush1.bf16.xpose.msra.mxu0 0
        %1181 = vmatprep.subr.bf16.mxu0 0
        %1182 = vmatpush1.bf16.xpose.msra.mxu0 0
        %1183 = vmatprep.subr.bf16.mxu0 0
        %1184 = vmatpush1.bf16.xpose.msra.mxu0 0
        %1185 = vmatprep.subr.bf16.mxu0 0
        %1186 = vmatpush1.bf16.xpose.msra.mxu0 0
        %1187 = vmatprep.subr.bf16.mxu0 0
        %1188 = vmatpush1.bf16.xpose.msra.mxu0 0
        %1189 = vmatprep.subr.bf16.mxu0 0
        %1190 = vmatpush1.bf16.xpose.msra.mxu0 0
        %1191 = vmatprep.subr.bf16.mxu0 0
        %1192 = vmatpush1.bf16.xpose.msra.mxu0 0
        %1193 = vmatprep.subr.bf16.mxu0 0
        %1194 = vmatpush1.bf16.xpose.msra.mxu0 0
        %1195 = vmatprep.subr.bf16.mxu0 0
        %1196 = vmatpush1.bf16.xpose.msra.mxu0 0
        %1197 = vmatprep.subr.bf16.mxu0 0
        %1198 = vmatpush1.bf16.xpose.msra.mxu0 0
        %1199 = vmatprep.subr.bf16.mxu0 0
        %1200 = vmatpush1.bf16.xpose.msra.mxu0 0
        %1201 = vmatprep.subr.bf16.mxu0 0
        %1202 = vmatpush1.bf16.xpose.msra.mxu0 0
        %1203 = vmatprep.subr.bf16.mxu0 0
        %1204 = vmatpush1.bf16.xpose.msra.mxu0 0
        %1205 = vmatprep.subr.bf16.mxu0 0
        %1206 = vmatpush1.bf16.xpose.msra.mxu0 0
        %1207 = vmatprep.subr.bf16.mxu0 0
        %1208 = vmatpush1.bf16.xpose.msra.mxu0 0
        %1209 = vmatprep.mubr.bf16.mxu0 0
        %1210 = vmatmul.mubr.bf16.gmra.mrb[0].mxu0 %v1172
        %v1211 = vpop.f32.mrb[0].mxu0
        %v1212 = vadd.f32 0.0, %v1211
        %v1213 = vpop.f32.mrb[0].mxu0
        %v1214 = vpop.f32.mrb[0].mxu0
        %v1215 = vpop.f32.mrb[0].mxu0
        %1216 = vdwg.mxu0
        %1217 = vrot.lane.b32.xlu0 %v710, 112
        %v1218 = vpop.permute.xlu0 %1217
        %1219 = vrot.lane.b32.xlu0 %v710, 80
        %v1220 = vpop.permute.xlu0 %1219
        %v1222 = vsel %vm713, %v1218, 0
        %v1225 = vsel %vm713, %v1220, 0
        %1227 = vmatprep.subr.bf16.mxu0 0
        %1228 = vmatpush1.bf16.xpose.msra.mxu0 %v1225
        %1229 = vmatprep.subr.bf16.mxu0 0
        %1230 = vmatpush1.bf16.xpose.msra.mxu0 0
        %1231 = vmatprep.subr.bf16.mxu0 0
        %1232 = vmatpush1.bf16.xpose.msra.mxu0 0
        %1233 = vmatprep.subr.bf16.mxu0 0
        %1234 = vmatpush1.bf16.xpose.msra.mxu0 0
        %1235 = vmatprep.subr.bf16.mxu0 0
        %1236 = vmatpush1.bf16.xpose.msra.mxu0 0
        %1237 = vmatprep.subr.bf16.mxu0 0
        %1238 = vmatpush1.bf16.xpose.msra.mxu0 0
        %1239 = vmatprep.subr.bf16.mxu0 0
        %1240 = vmatpush1.bf16.xpose.msra.mxu0 0
        %1241 = vmatprep.subr.bf16.mxu0 0
        %1242 = vmatpush1.bf16.xpose.msra.mxu0 0
        %1243 = vmatprep.subr.bf16.mxu0 0
        %1244 = vmatpush1.bf16.xpose.msra.mxu0 0
        %1245 = vmatprep.subr.bf16.mxu0 0
        %1246 = vmatpush1.bf16.xpose.msra.mxu0 0
        %1247 = vmatprep.subr.bf16.mxu0 0
        %1248 = vmatpush1.bf16.xpose.msra.mxu0 0
        %1249 = vmatprep.subr.bf16.mxu0 0
        %1250 = vmatpush1.bf16.xpose.msra.mxu0 0
        %1251 = vmatprep.subr.bf16.mxu0 0
        %1252 = vmatpush1.bf16.xpose.msra.mxu0 0
        %1253 = vmatprep.subr.bf16.mxu0 0
        %1254 = vmatpush1.bf16.xpose.msra.mxu0 0
        %1255 = vmatprep.subr.bf16.mxu0 0
        %1256 = vmatpush1.bf16.xpose.msra.mxu0 0
        %1257 = vmatprep.subr.bf16.mxu0 0
        %1258 = vmatpush1.bf16.xpose.msra.mxu0 0
        %1259 = vmatprep.mubr.bf16.mxu0 0
        %1260 = vmatmul.mubr.bf16.gmra.mrb[0].mxu0 %v1222
        %v1261 = vpop.f32.mrb[0].mxu0
        %v1262 = vadd.f32 0.0, %v1261
        %v1263 = vpop.f32.mrb[0].mxu0
        %v1264 = vpop.f32.mrb[0].mxu0
        %v1265 = vpop.f32.mrb[0].mxu0
        %1266 = vdwg.mxu0
        %v1267 = vmul.f32 %v1212, 0.35355338
        %v1268 = vmul.f32 %v1262, 0.35355338
        %v1269 = vadd.f32 %v1267, %v813
        %v1270 = vadd.f32 %v1268, %v817
        %v1271 = vsel %vm713, %v1269, -inf
        %1272 = vmax.xlane.f32.xlu0 %v1271
        %v1273 = vpop.xlane.xlu0 %1272
        %v1274 = vsel %vm713, %v1270, -inf
        %1275 = vmax.xlane.f32.xlu0 %v1274
        %v1276 = vpop.xlane.xlu0 %1275
        %v1277 = vsub.f32 %v1269, %v1273
        %v1278 = vsub.f32 %v1270, %v1276
        %v1279 = vmul.f32 %v1277, 1.442695
        %v1280 = vpow.pop %v1279
        %v1281 = vmul.f32 %v1278, 1.442695
        %v1282 = vpow.pop %v1281
        %v1283 = vsel %vm713, %v1280, 0.0
        %1284 = vadd.xlane.f32.xlu0 %v1283
        %v1285 = vpop.xlane.xlu0 %1284
        %v1286 = vsel %vm713, %v1282, 0.0
        %1287 = vadd.xlane.f32.xlu0 %v1286
        %v1288 = vpop.xlane.xlu0 %1287
        %v1289 = vrcp.pop %v1285
        %v1290 = vrcp.pop %v1288
        %v1291 = vmul.f32 %v1280, %v1289
        %v1292 = vmul.f32 %v1282, %v1290
        %v1293 = vpack.c.bf16 %v1291, %v1291
        %v1294 = vpack.c.bf16 %v1292, %v1292
        %1295 = vrot.lane.b32.xlu0 %v709, 48
        %v1296 = vpop.permute.xlu0 %1295
        %v1298 = vsel %vm713, %v1293, 0
        %v1301 = vsel %vm851, %v1296, 0
        %1303 = vmatprep.subr.bf16.mxu0 0
        %1304 = vmatpush1.bf16.msra.mxu0 %v1301
        %1305 = vmatprep.subr.bf16.mxu0 0
        %1306 = vmatpush1.bf16.msra.mxu0 0
        %1307 = vmatprep.subr.bf16.mxu0 0
        %1308 = vmatpush1.bf16.msra.mxu0 0
        %1309 = vmatprep.subr.bf16.mxu0 0
        %1310 = vmatpush1.bf16.msra.mxu0 0
        %1311 = vmatprep.subr.bf16.mxu0 0
        %1312 = vmatpush1.bf16.msra.mxu0 0
        %1313 = vmatprep.subr.bf16.mxu0 0
        %1314 = vmatpush1.bf16.msra.mxu0 0
        %1315 = vmatprep.subr.bf16.mxu0 0
        %1316 = vmatpush1.bf16.msra.mxu0 0
        %1317 = vmatprep.subr.bf16.mxu0 0
        %1318 = vmatpush1.bf16.msra.mxu0 0
        %1319 = vmatprep.subr.bf16.mxu0 0
        %1320 = vmatpush1.bf16.msra.mxu0 0
        %1321 = vmatprep.subr.bf16.mxu0 0
        %1322 = vmatpush1.bf16.msra.mxu0 0
        %1323 = vmatprep.subr.bf16.mxu0 0
        %1324 = vmatpush1.bf16.msra.mxu0 0
        %1325 = vmatprep.subr.bf16.mxu0 0
        %1326 = vmatpush1.bf16.msra.mxu0 0
        %1327 = vmatprep.subr.bf16.mxu0 0
        %1328 = vmatpush1.bf16.msra.mxu0 0
        %1329 = vmatprep.subr.bf16.mxu0 0
        %1330 = vmatpush1.bf16.msra.mxu0 0
        %1331 = vmatprep.subr.bf16.mxu0 0
        %1332 = vmatpush1.bf16.msra.mxu0 0
        %1333 = vmatprep.subr.bf16.mxu0 0
        %1334 = vmatpush1.bf16.msra.mxu0 0
        %1335 = vmatprep.mubr.bf16.mxu0 0
        %1336 = vmatmul.mubr.bf16.gmra.mrb[0].mxu0 %v1298
        %v1337 = vpop.f32.mrb[0].mxu0
        %v1338 = vadd.f32 0.0, %v1337
        %v1339 = vpop.f32.mrb[0].mxu0
        %v1340 = vpop.f32.mrb[0].mxu0
        %v1341 = vpop.f32.mrb[0].mxu0
        %1342 = vdwg.mxu0
        %1343 = vrot.lane.b32.xlu0 %v710, 48
        %v1344 = vpop.permute.xlu0 %1343
        %v1346 = vsel %vm713, %v1294, 0
        %v1349 = vsel %vm851, %v1344, 0
        %1351 = vmatprep.subr.bf16.mxu0 0
        %1352 = vmatpush1.bf16.msra.mxu0 %v1349
        %1353 = vmatprep.subr.bf16.mxu0 0
        %1354 = vmatpush1.bf16.msra.mxu0 0
        %1355 = vmatprep.subr.bf16.mxu0 0
        %1356 = vmatpush1.bf16.msra.mxu0 0
        %1357 = vmatprep.subr.bf16.mxu0 0
        %1358 = vmatpush1.bf16.msra.mxu0 0
        %1359 = vmatprep.subr.bf16.mxu0 0
        %1360 = vmatpush1.bf16.msra.mxu0 0
        %1361 = vmatprep.subr.bf16.mxu0 0
        %1362 = vmatpush1.bf16.msra.mxu0 0
        %1363 = vmatprep.subr.bf16.mxu0 0
        %1364 = vmatpush1.bf16.msra.mxu0 0
        %1365 = vmatprep.subr.bf16.mxu0 0
        %1366 = vmatpush1.bf16.msra.mxu0 0
        %1367 = vmatprep.subr.bf16.mxu0 0
        %1368 = vmatpush1.bf16.msra.mxu0 0
        %1369 = vmatprep.subr.bf16.mxu0 0
        %1370 = vmatpush1.bf16.msra.mxu0 0
        %1371 = vmatprep.subr.bf16.mxu0 0
        %1372 = vmatpush1.bf16.msra.mxu0 0
        %1373 = vmatprep.subr.bf16.mxu0 0
        %1374 = vmatpush1.bf16.msra.mxu0 0
        %1375 = vmatprep.subr.bf16.mxu0 0
        %1376 = vmatpush1.bf16.msra.mxu0 0
        %1377 = vmatprep.subr.bf16.mxu0 0
        %1378 = vmatpush1.bf16.msra.mxu0 0
        %1379 = vmatprep.subr.bf16.mxu0 0
        %1380 = vmatpush1.bf16.msra.mxu0 0
        %1381 = vmatprep.subr.bf16.mxu0 0
        %1382 = vmatpush1.bf16.msra.mxu0 0
        %1383 = vmatprep.mubr.bf16.mxu0 0
        %1384 = vmatmul.mubr.bf16.gmra.mrb[0].mxu0 %v1346
        %v1385 = vpop.f32.mrb[0].mxu0
        %v1386 = vadd.f32 0.0, %v1385
        %v1387 = vpop.f32.mrb[0].mxu0
        %v1388 = vpop.f32.mrb[0].mxu0
        %v1389 = vpop.f32.mrb[0].mxu0
        %1390 = vdwg.mxu0
        %1391 = vrot.lane.b32.xlu0 %v709, 104
        %v1392 = vpop.permute.xlu0 %1391
        %1393 = vrot.lane.b32.xlu0 %v709, 72
        %v1394 = vpop.permute.xlu0 %1393
        %v1396 = vsel %vm713, %v1392, 0
        %v1399 = vsel %vm713, %v1394, 0
        %1401 = vmatprep.subr.bf16.mxu0 0
        %1402 = vmatpush1.bf16.xpose.msra.mxu0 %v1399
        %1403 = vmatprep.subr.bf16.mxu0 0
        %1404 = vmatpush1.bf16.xpose.msra.mxu0 0
        %1405 = vmatprep.subr.bf16.mxu0 0
        %1406 = vmatpush1.bf16.xpose.msra.mxu0 0
        %1407 = vmatprep.subr.bf16.mxu0 0
        %1408 = vmatpush1.bf16.xpose.msra.mxu0 0
        %1409 = vmatprep.subr.bf16.mxu0 0
        %1410 = vmatpush1.bf16.xpose.msra.mxu0 0
        %1411 = vmatprep.subr.bf16.mxu0 0
        %1412 = vmatpush1.bf16.xpose.msra.mxu0 0
        %1413 = vmatprep.subr.bf16.mxu0 0
        %1414 = vmatpush1.bf16.xpose.msra.mxu0 0
        %1415 = vmatprep.subr.bf16.mxu0 0
        %1416 = vmatpush1.bf16.xpose.msra.mxu0 0
        %1417 = vmatprep.subr.bf16.mxu0 0
        %1418 = vmatpush1.bf16.xpose.msra.mxu0 0
        %1419 = vmatprep.subr.bf16.mxu0 0
        %1420 = vmatpush1.bf16.xpose.msra.mxu0 0
        %1421 = vmatprep.subr.bf16.mxu0 0
        %1422 = vmatpush1.bf16.xpose.msra.mxu0 0
        %1423 = vmatprep.subr.bf16.mxu0 0
        %1424 = vmatpush1.bf16.xpose.msra.mxu0 0
        %1425 = vmatprep.subr.bf16.mxu0 0
        %1426 = vmatpush1.bf16.xpose.msra.mxu0 0
        %1427 = vmatprep.subr.bf16.mxu0 0
        %1428 = vmatpush1.bf16.xpose.msra.mxu0 0
        %1429 = vmatprep.subr.bf16.mxu0 0
        %1430 = vmatpush1.bf16.xpose.msra.mxu0 0
        %1431 = vmatprep.subr.bf16.mxu0 0
        %1432 = vmatpush1.bf16.xpose.msra.mxu0 0
        %1433 = vmatprep.mubr.bf16.mxu0 0
        %1434 = vmatmul.mubr.bf16.gmra.mrb[0].mxu0 %v1396
        %v1435 = vpop.f32.mrb[0].mxu0
        %v1436 = vadd.f32 0.0, %v1435
        %v1437 = vpop.f32.mrb[0].mxu0
        %v1438 = vpop.f32.mrb[0].mxu0
        %v1439 = vpop.f32.mrb[0].mxu0
        %1440 = vdwg.mxu0
        %1441 = vrot.lane.b32.xlu0 %v710, 104
        %v1442 = vpop.permute.xlu0 %1441
        %1443 = vrot.lane.b32.xlu0 %v710, 72
        %v1444 = vpop.permute.xlu0 %1443
        %v1446 = vsel %vm713, %v1442, 0
        %v1449 = vsel %vm713, %v1444, 0
        %1451 = vmatprep.subr.bf16.mxu0 0
        %1452 = vmatpush1.bf16.xpose.msra.mxu0 %v1449
        %1453 = vmatprep.subr.bf16.mxu0 0
        %1454 = vmatpush1.bf16.xpose.msra.mxu0 0
        %1455 = vmatprep.subr.bf16.mxu0 0
        %1456 = vmatpush1.bf16.xpose.msra.mxu0 0
        %1457 = vmatprep.subr.bf16.mxu0 0
        %1458 = vmatpush1.bf16.xpose.msra.mxu0 0
        %1459 = vmatprep.subr.bf16.mxu0 0
        %1460 = vmatpush1.bf16.xpose.msra.mxu0 0
        %1461 = vmatprep.subr.bf16.mxu0 0
        %1462 = vmatpush1.bf16.xpose.msra.mxu0 0
        %1463 = vmatprep.subr.bf16.mxu0 0
        %1464 = vmatpush1.bf16.xpose.msra.mxu0 0
        %1465 = vmatprep.subr.bf16.mxu0 0
        %1466 = vmatpush1.bf16.xpose.msra.mxu0 0
        %1467 = vmatprep.subr.bf16.mxu0 0
        %1468 = vmatpush1.bf16.xpose.msra.mxu0 0
        %1469 = vmatprep.subr.bf16.mxu0 0
        %1470 = vmatpush1.bf16.xpose.msra.mxu0 0
        %1471 = vmatprep.subr.bf16.mxu0 0
        %1472 = vmatpush1.bf16.xpose.msra.mxu0 0
        %1473 = vmatprep.subr.bf16.mxu0 0
        %1474 = vmatpush1.bf16.xpose.msra.mxu0 0
        %1475 = vmatprep.subr.bf16.mxu0 0
        %1476 = vmatpush1.bf16.xpose.msra.mxu0 0
        %1477 = vmatprep.subr.bf16.mxu0 0
        %1478 = vmatpush1.bf16.xpose.msra.mxu0 0
        %1479 = vmatprep.subr.bf16.mxu0 0
        %1480 = vmatpush1.bf16.xpose.msra.mxu0 0
        %1481 = vmatprep.subr.bf16.mxu0 0
        %1482 = vmatpush1.bf16.xpose.msra.mxu0 0
        %1483 = vmatprep.mubr.bf16.mxu0 0
        %1484 = vmatmul.mubr.bf16.gmra.mrb[0].mxu0 %v1446
        %v1485 = vpop.f32.mrb[0].mxu0
        %v1486 = vadd.f32 0.0, %v1485
        %v1487 = vpop.f32.mrb[0].mxu0
        %v1488 = vpop.f32.mrb[0].mxu0
        %v1489 = vpop.f32.mrb[0].mxu0
        %1490 = vdwg.mxu0
        %v1491 = vmul.f32 %v1436, 0.35355338
        %v1492 = vmul.f32 %v1486, 0.35355338
        %v1493 = vadd.f32 %v1491, %v813
        %v1494 = vadd.f32 %v1492, %v817
        %v1495 = vsel %vm713, %v1493, -inf
        %1496 = vmax.xlane.f32.xlu0 %v1495
        %v1497 = vpop.xlane.xlu0 %1496
        %v1498 = vsel %vm713, %v1494, -inf
        %1499 = vmax.xlane.f32.xlu0 %v1498
        %v1500 = vpop.xlane.xlu0 %1499
        %v1501 = vsub.f32 %v1493, %v1497
        %v1502 = vsub.f32 %v1494, %v1500
        %v1503 = vmul.f32 %v1501, 1.442695
        %v1504 = vpow.pop %v1503
        %v1505 = vmul.f32 %v1502, 1.442695
        %v1506 = vpow.pop %v1505
        %v1507 = vsel %vm713, %v1504, 0.0
        %1508 = vadd.xlane.f32.xlu0 %v1507
        %v1509 = vpop.xlane.xlu0 %1508
        %v1510 = vsel %vm713, %v1506, 0.0
        %1511 = vadd.xlane.f32.xlu0 %v1510
        %v1512 = vpop.xlane.xlu0 %1511
        %v1513 = vrcp.pop %v1509
        %v1514 = vrcp.pop %v1512
        %v1515 = vmul.f32 %v1504, %v1513
        %v1516 = vmul.f32 %v1506, %v1514
        %v1517 = vpack.c.bf16 %v1515, %v1515
        %v1518 = vpack.c.bf16 %v1516, %v1516
        %1519 = vrot.lane.b32.xlu0 %v709, 40
        %v1520 = vpop.permute.xlu0 %1519
        %v1522 = vsel %vm713, %v1517, 0
        %v1525 = vsel %vm851, %v1520, 0
        %1527 = vmatprep.subr.bf16.mxu0 0
        %1528 = vmatpush1.bf16.msra.mxu0 %v1525
        %1529 = vmatprep.subr.bf16.mxu0 0
        %1530 = vmatpush1.bf16.msra.mxu0 0
        %1531 = vmatprep.subr.bf16.mxu0 0
        %1532 = vmatpush1.bf16.msra.mxu0 0
        %1533 = vmatprep.subr.bf16.mxu0 0
        %1534 = vmatpush1.bf16.msra.mxu0 0
        %1535 = vmatprep.subr.bf16.mxu0 0
        %1536 = vmatpush1.bf16.msra.mxu0 0
        %1537 = vmatprep.subr.bf16.mxu0 0
        %1538 = vmatpush1.bf16.msra.mxu0 0
        %1539 = vmatprep.subr.bf16.mxu0 0
        %1540 = vmatpush1.bf16.msra.mxu0 0
        %1541 = vmatprep.subr.bf16.mxu0 0
        %1542 = vmatpush1.bf16.msra.mxu0 0
        %1543 = vmatprep.subr.bf16.mxu0 0
        %1544 = vmatpush1.bf16.msra.mxu0 0
        %1545 = vmatprep.subr.bf16.mxu0 0
        %1546 = vmatpush1.bf16.msra.mxu0 0
        %1547 = vmatprep.subr.bf16.mxu0 0
        %1548 = vmatpush1.bf16.msra.mxu0 0
        %1549 = vmatprep.subr.bf16.mxu0 0
        %1550 = vmatpush1.bf16.msra.mxu0 0
        %1551 = vmatprep.subr.bf16.mxu0 0
        %1552 = vmatpush1.bf16.msra.mxu0 0
        %1553 = vmatprep.subr.bf16.mxu0 0
        %1554 = vmatpush1.bf16.msra.mxu0 0
        %1555 = vmatprep.subr.bf16.mxu0 0
        %1556 = vmatpush1.bf16.msra.mxu0 0
        %1557 = vmatprep.subr.bf16.mxu0 0
        %1558 = vmatpush1.bf16.msra.mxu0 0
        %1559 = vmatprep.mubr.bf16.mxu0 0
        %1560 = vmatmul.mubr.bf16.gmra.mrb[0].mxu0 %v1522
        %v1561 = vpop.f32.mrb[0].mxu0
        %v1562 = vadd.f32 0.0, %v1561
        %v1563 = vpop.f32.mrb[0].mxu0
        %v1564 = vpop.f32.mrb[0].mxu0
        %v1565 = vpop.f32.mrb[0].mxu0
        %1566 = vdwg.mxu0
        %1567 = vrot.lane.b32.xlu0 %v710, 40
        %v1568 = vpop.permute.xlu0 %1567
        %v1570 = vsel %vm713, %v1518, 0
        %v1573 = vsel %vm851, %v1568, 0
        %1575 = vmatprep.subr.bf16.mxu0 0
        %1576 = vmatpush1.bf16.msra.mxu0 %v1573
        %1577 = vmatprep.subr.bf16.mxu0 0
        %1578 = vmatpush1.bf16.msra.mxu0 0
        %1579 = vmatprep.subr.bf16.mxu0 0
        %1580 = vmatpush1.bf16.msra.mxu0 0
        %1581 = vmatprep.subr.bf16.mxu0 0
        %1582 = vmatpush1.bf16.msra.mxu0 0
        %1583 = vmatprep.subr.bf16.mxu0 0
        %1584 = vmatpush1.bf16.msra.mxu0 0
        %1585 = vmatprep.subr.bf16.mxu0 0
        %1586 = vmatpush1.bf16.msra.mxu0 0
        %1587 = vmatprep.subr.bf16.mxu0 0
        %1588 = vmatpush1.bf16.msra.mxu0 0
        %1589 = vmatprep.subr.bf16.mxu0 0
        %1590 = vmatpush1.bf16.msra.mxu0 0
        %1591 = vmatprep.subr.bf16.mxu0 0
        %1592 = vmatpush1.bf16.msra.mxu0 0
        %1593 = vmatprep.subr.bf16.mxu0 0
        %1594 = vmatpush1.bf16.msra.mxu0 0
        %1595 = vmatprep.subr.bf16.mxu0 0
        %1596 = vmatpush1.bf16.msra.mxu0 0
        %1597 = vmatprep.subr.bf16.mxu0 0
        %1598 = vmatpush1.bf16.msra.mxu0 0
        %1599 = vmatprep.subr.bf16.mxu0 0
        %1600 = vmatpush1.bf16.msra.mxu0 0
        %1601 = vmatprep.subr.bf16.mxu0 0
        %1602 = vmatpush1.bf16.msra.mxu0 0
        %1603 = vmatprep.subr.bf16.mxu0 0
        %1604 = vmatpush1.bf16.msra.mxu0 0
        %1605 = vmatprep.subr.bf16.mxu0 0
        %1606 = vmatpush1.bf16.msra.mxu0 0
        %1607 = vmatprep.mubr.bf16.mxu0 0
        %1608 = vmatmul.mubr.bf16.gmra.mrb[0].mxu0 %v1570
        %v1609 = vpop.f32.mrb[0].mxu0
        %v1610 = vadd.f32 0.0, %v1609
        %v1611 = vpop.f32.mrb[0].mxu0
        %v1612 = vpop.f32.mrb[0].mxu0
        %v1613 = vpop.f32.mrb[0].mxu0
        %1614 = vdwg.mxu0
        %1617 = vrot.lane.b32.xlu0 %v1114, 8
        %v1618 = vpop.permute.xlu0 %1617
        %1619 = vrot.lane.b32.xlu0 %v1162, 8
        %v1620 = vpop.permute.xlu0 %1619
        %1625 = vrot.lane.b32.xlu0 %v1338, 16
        %v1626 = vpop.permute.xlu0 %1625
        %1627 = vrot.lane.b32.xlu0 %v1386, 16
        %v1628 = vpop.permute.xlu0 %1627
        %1633 = vrot.lane.b32.xlu0 %v1562, 24
        %v1634 = vpop.permute.xlu0 %1633
        %1635 = vrot.lane.b32.xlu0 %v1610, 24
        %v1636 = vpop.permute.xlu0 %1635
        %v1639 = vsel %vm713, %v890, %v1618
        %v1640 = vsel %vm713, %v938, %v1620
        %vm1641 = vcmask 130048
        %v1642 = vsel %vm1641, %v1639, %v1626
        %v1643 = vsel %vm1641, %v1640, %v1628
        %vm1644 = vcmask 195584
        %v1645 = vsel %vm1644, %v1642, %v1634
        %v1646 = vsel %vm1644, %v1643, %v1636
        %v1647 = vpack.c.bf16 %v1646, %v1645
        %v1648 = vld [vmem:[%s558] sm:$0x3f]
        %v1649 = vld [vmem:[%s541] sm:$0xf]
        %v1650 = vld [vmem:[%s541 + $0x4] sm:$0xf]
        %v1651 = vld [vmem:[%s541 + $0x8] sm:$0xf]
        %v1652 = vld [vmem:[%s541 + $0xc] sm:$0xf]
        %v1653 = vlaneseq
        %v1654 = vshrl.u32 %v1653, 7
        %v1655 = vsub.s32 0, %v1654
        %v1656 = vrot.slane %v1648, %v1655
        %v1661 = vunpack.c.l.b16 %v1649
        %v1662 = vunpack.c.l.b16 %v1650
        %v1663 = vunpack.c.l.b16 %v1651
        %v1664 = vunpack.c.l.b16 %v1652
        %v1665 = vpack.c.b16 %v1662, %v1661
        %v1666 = vpack.c.b16 %v1664, %v1663
        %v1670 = vsel %vm636, %v1647, 0
        %1672 = vmatprep.subr.bf16.mxu0 0
        %1673 = vmatpush1.bf16.msra.mxu0 %v1665
        %1674 = vmatprep.subr.bf16.mxu0 0
        %1675 = vmatpush1.bf16.msra.mxu0 %v1666
        %1676 = vmatprep.subr.bf16.mxu0 0
        %1677 = vmatpush1.bf16.msra.mxu0 0
        %1678 = vmatprep.subr.bf16.mxu0 0
        %1679 = vmatpush1.bf16.msra.mxu0 0
        %1680 = vmatprep.subr.bf16.mxu0 0
        %1681 = vmatpush1.bf16.msra.mxu0 0
        %1682 = vmatprep.subr.bf16.mxu0 0
        %1683 = vmatpush1.bf16.msra.mxu0 0
        %1684 = vmatprep.subr.bf16.mxu0 0
        %1685 = vmatpush1.bf16.msra.mxu0 0
        %1686 = vmatprep.subr.bf16.mxu0 0
        %1687 = vmatpush1.bf16.msra.mxu0 0
        %1688 = vmatprep.subr.bf16.mxu0 0
        %1689 = vmatpush1.bf16.msra.mxu0 0
        %1690 = vmatprep.subr.bf16.mxu0 0
        %1691 = vmatpush1.bf16.msra.mxu0 0
        %1692 = vmatprep.subr.bf16.mxu0 0
        %1693 = vmatpush1.bf16.msra.mxu0 0
        %1694 = vmatprep.subr.bf16.mxu0 0
        %1695 = vmatpush1.bf16.msra.mxu0 0
        %1696 = vmatprep.subr.bf16.mxu0 0
        %1697 = vmatpush1.bf16.msra.mxu0 0
        %1698 = vmatprep.subr.bf16.mxu0 0
        %1699 = vmatpush1.bf16.msra.mxu0 0
        %1700 = vmatprep.subr.bf16.mxu0 0
        %1701 = vmatpush1.bf16.msra.mxu0 0
        %1702 = vmatprep.subr.bf16.mxu0 0
        %1703 = vmatpush1.bf16.msra.mxu0 0
        %1704 = vmatprep.mubr.bf16.mxu0 0
        %1705 = vmatmul.mubr.bf16.gmra.mrb[0].mxu0 %v1670
        %v1706 = vpop.f32.mrb[0].mxu0
        %v1707 = vadd.f32 %v1656, %v1706
        %v1708 = vpop.f32.mrb[0].mxu0
        %v1709 = vpop.f32.mrb[0].mxu0
        %v1710 = vadd.f32 %v1656, %v1709
        %v1711 = vpop.f32.mrb[0].mxu0
        %1712 = vdwg.mxu0
        %v1713 = vadd.f32 %v1707, %v610
        %v1714 = vadd.f32 %v1710, %v611
        %v1715 = vsel %vm636, %v1713, 0.0
        %1716 = vadd.xlane.f32.xlu0 %v1715
        %v1717 = vpop.xlane.xlu0 %1716
        %v1718 = vsel %vm636, %v1714, 0.0
        %1719 = vadd.xlane.f32.xlu0 %v1718
        %v1720 = vpop.xlane.xlu0 %1719
        %v1721 = vrcp.pop 32.0
        %v1722 = vmul.f32 %v1717, %v1721
        %v1723 = vmul.f32 %v1720, %v1721
        %v1724 = vsub.f32 %v1713, %v1722
        %v1725 = vsub.f32 %v1714, %v1723
        %v1726 = vmul.f32 %v1724, %v1724
        %v1727 = vmul.f32 %v1725, %v1725
        %v1728 = vsel %vm636, %v1726, 0.0
        %1729 = vadd.xlane.f32.xlu0 %v1728
        %v1730 = vpop.xlane.xlu0 %1729
        %v1731 = vsel %vm636, %v1727, 0.0
        %1732 = vadd.xlane.f32.xlu0 %v1731
        %v1733 = vpop.xlane.xlu0 %1732
        %v1734 = vmul.f32 %v1730, %v1721
        %v1735 = vmul.f32 %v1733, %v1721
        %v1736 = vadd.f32 %v1734, 1e-12
        %v1737 = vadd.f32 %v1735, 1e-12
        %v1738 = vrsqrt.pop %v1736
        %v1739 = vrsqrt.pop %v1737
        %v1740 = vmul.f32 %v1724, %v1738
        %v1741 = vmul.f32 %v1725, %v1739
        %v1742 = vlaneseq
        %v1743 = vshrl.u32 %v1742, 7
        %v1744 = vsub.s32 1, %v1743
        %v1745 = vrot.slane %v1648, %v1744
        %v1746 = vmul.f32 %v1740, %v1745
        %v1747 = vmul.f32 %v1741, %v1745
        %v1748 = vlaneseq
        %v1749 = vshrl.u32 %v1748, 7
        %v1750 = vsub.s32 2, %v1749
        %v1751 = vrot.slane %v1648, %v1750
        %v1752 = vadd.f32 %v1746, %v1751
        %v1753 = vadd.f32 %v1747, %v1751
        %v1754 = vpack.c.bf16 %v1753, %v1752
        %v1755 = vld [vmem:[%s546] sm:$0xf]
        %v1756 = vld [vmem:[%s546 + $0x4] sm:$0xf]
        %v1757 = vld [vmem:[%s546 + $0x8] sm:$0xf]
        %v1758 = vld [vmem:[%s546 + $0xc] sm:$0xf]
        %v1759 = vld [vmem:[%s549] sm:$0x1]
        %v1761 = vlaneseq
        %v1762 = vshrl.u32 %v1761, 7
        %v1763 = vsub.s32 0, %v1762
        %v1764 = vrot.slane %v1759, %v1763
        %v1770 = vunpack.c.l.b16 %v1755
        %v1771 = vunpack.c.l.b16 %v1756
        %v1772 = vunpack.c.l.b16 %v1757
        %v1773 = vunpack.c.l.b16 %v1758
        %v1774 = vpack.c.b16 %v1771, %v1770
        %v1775 = vpack.c.b16 %v1773, %v1772
        %v1779 = vsel %vm636, %v1754, 0
        %1781 = vmatprep.subr.bf16.mxu0 0
        %1782 = vmatpush1.bf16.msra.mxu0 %v1774
        %1783 = vmatprep.subr.bf16.mxu0 0
        %1784 = vmatpush1.bf16.msra.mxu0 %v1775
        %1785 = vmatprep.subr.bf16.mxu0 0
        %1786 = vmatpush1.bf16.msra.mxu0 0
        %1787 = vmatprep.subr.bf16.mxu0 0
        %1788 = vmatpush1.bf16.msra.mxu0 0
        %1789 = vmatprep.subr.bf16.mxu0 0
        %1790 = vmatpush1.bf16.msra.mxu0 0
        %1791 = vmatprep.subr.bf16.mxu0 0
        %1792 = vmatpush1.bf16.msra.mxu0 0
        %1793 = vmatprep.subr.bf16.mxu0 0
        %1794 = vmatpush1.bf16.msra.mxu0 0
        %1795 = vmatprep.subr.bf16.mxu0 0
        %1796 = vmatpush1.bf16.msra.mxu0 0
        %1797 = vmatprep.subr.bf16.mxu0 0
        %1798 = vmatpush1.bf16.msra.mxu0 0
        %1799 = vmatprep.subr.bf16.mxu0 0
        %1800 = vmatpush1.bf16.msra.mxu0 0
        %1801 = vmatprep.subr.bf16.mxu0 0
        %1802 = vmatpush1.bf16.msra.mxu0 0
        %1803 = vmatprep.subr.bf16.mxu0 0
        %1804 = vmatpush1.bf16.msra.mxu0 0
        %1805 = vmatprep.subr.bf16.mxu0 0
        %1806 = vmatpush1.bf16.msra.mxu0 0
        %1807 = vmatprep.subr.bf16.mxu0 0
        %1808 = vmatpush1.bf16.msra.mxu0 0
        %1809 = vmatprep.subr.bf16.mxu0 0
        %1810 = vmatpush1.bf16.msra.mxu0 0
        %1811 = vmatprep.subr.bf16.mxu0 0
        %1812 = vmatpush1.bf16.msra.mxu0 0
        %1813 = vmatprep.mubr.bf16.mxu0 0
        %1814 = vmatmul.mubr.bf16.gmra.mrb[0].mxu0 %v1779
        %v1815 = vpop.f32.mrb[0].mxu0
        %v1816 = vadd.f32 %v1764, %v1815
        %v1817 = vpop.f32.mrb[0].mxu0
        %v1818 = vpop.f32.mrb[0].mxu0
        %v1819 = vadd.f32 %v1764, %v1818
        %v1820 = vpop.f32.mrb[0].mxu0
        %1821 = vdwg.mxu0
        %v1822 = vmul.f32 %v1816, 0.5
        %v1823 = vmul.f32 %v1819, 0.5
        %v1824 = vmul.f32 %v1816, 0.70710677
        %v1825 = vmul.f32 %v1819, 0.70710677
        %v1826 = verf.f32.pop %v1824
        %v1827 = verf.f32.pop %v1825
        %v1828 = vadd.f32 %v1826, 1.0
        %v1829 = vadd.f32 %v1827, 1.0
        %v1830 = vmul.f32 %v1822, %v1828
        %v1831 = vmul.f32 %v1823, %v1829
        %v1832 = vpack.c.bf16 %v1831, %v1830
        %v1833 = vld [vmem:[%s554] sm:$0xf]
        %v1834 = vld [vmem:[%s554 + $0x4] sm:$0xf]
        %v1835 = vld [vmem:[%s554 + $0x8] sm:$0xf]
        %v1836 = vld [vmem:[%s554 + $0xc] sm:$0xf]
        %v1837 = vld [vmem:[%s554 + $0x10] sm:$0xf]
        %v1838 = vld [vmem:[%s554 + $0x14] sm:$0xf]
        %v1839 = vld [vmem:[%s554 + $0x18] sm:$0xf]
        %v1840 = vld [vmem:[%s554 + $0x1c] sm:$0xf]
        %v1841 = vlaneseq
        %v1842 = vshrl.u32 %v1841, 7
        %v1843 = vsub.s32 3, %v1842
        %v1844 = vrot.slane %v1648, %v1843
        %v1853 = vunpack.c.l.b16 %v1833
        %v1854 = vunpack.c.l.b16 %v1834
        %v1855 = vunpack.c.l.b16 %v1835
        %v1856 = vunpack.c.l.b16 %v1836
        %v1857 = vunpack.c.l.b16 %v1837
        %v1858 = vunpack.c.l.b16 %v1838
        %v1859 = vunpack.c.l.b16 %v1839
        %v1860 = vunpack.c.l.b16 %v1840
        %v1861 = vpack.c.b16 %v1854, %v1853
        %v1862 = vpack.c.b16 %v1856, %v1855
        %v1863 = vpack.c.b16 %v1858, %v1857
        %v1864 = vpack.c.b16 %v1860, %v1859
        %vm1869 = vcmask 523264
        %v1871 = vsel %vm1869, %v1832, 0
        %1873 = vmatprep.subr.bf16.mxu0 0
        %1874 = vmatpush1.bf16.msra.mxu0 %v1861
        %1875 = vmatprep.subr.bf16.mxu0 0
        %1876 = vmatpush1.bf16.msra.mxu0 %v1862
        %1877 = vmatprep.subr.bf16.mxu0 0
        %1878 = vmatpush1.bf16.msra.mxu0 %v1863
        %1879 = vmatprep.subr.bf16.mxu0 0
        %1880 = vmatpush1.bf16.msra.mxu0 %v1864
        %1881 = vmatprep.subr.bf16.mxu0 0
        %1882 = vmatpush1.bf16.msra.mxu0 0
        %1883 = vmatprep.subr.bf16.mxu0 0
        %1884 = vmatpush1.bf16.msra.mxu0 0
        %1885 = vmatprep.subr.bf16.mxu0 0
        %1886 = vmatpush1.bf16.msra.mxu0 0
        %1887 = vmatprep.subr.bf16.mxu0 0
        %1888 = vmatpush1.bf16.msra.mxu0 0
        %1889 = vmatprep.subr.bf16.mxu0 0
        %1890 = vmatpush1.bf16.msra.mxu0 0
        %1891 = vmatprep.subr.bf16.mxu0 0
        %1892 = vmatpush1.bf16.msra.mxu0 0
        %1893 = vmatprep.subr.bf16.mxu0 0
        %1894 = vmatpush1.bf16.msra.mxu0 0
        %1895 = vmatprep.subr.bf16.mxu0 0
        %1896 = vmatpush1.bf16.msra.mxu0 0
        %1897 = vmatprep.subr.bf16.mxu0 0
        %1898 = vmatpush1.bf16.msra.mxu0 0
        %1899 = vmatprep.subr.bf16.mxu0 0
        %1900 = vmatpush1.bf16.msra.mxu0 0
        %1901 = vmatprep.subr.bf16.mxu0 0
        %1902 = vmatpush1.bf16.msra.mxu0 0
        %1903 = vmatprep.subr.bf16.mxu0 0
        %1904 = vmatpush1.bf16.msra.mxu0 0
        %1905 = vmatprep.mubr.bf16.mxu0 0
        %1906 = vmatmul.mubr.bf16.gmra.mrb[0].mxu0 %v1871
        %v1907 = vpop.f32.mrb[0].mxu0
        %v1908 = vadd.f32 %v1844, %v1907
        %v1909 = vpop.f32.mrb[0].mxu0
        %v1910 = vpop.f32.mrb[0].mxu0
        %v1911 = vadd.f32 %v1844, %v1910
        %v1912 = vpop.f32.mrb[0].mxu0
        %1913 = vdwg.mxu0
        %v1914 = vadd.f32 %v1908, %v1752
        %v1915 = vadd.f32 %v1911, %v1753
        %v1916 = vsel %vm636, %v1914, 0.0
        %1917 = vadd.xlane.f32.xlu0 %v1916
        %v1918 = vpop.xlane.xlu0 %1917
        %v1919 = vsel %vm636, %v1915, 0.0
        %1920 = vadd.xlane.f32.xlu0 %v1919
        %v1921 = vpop.xlane.xlu0 %1920
        %v1922 = vmul.f32 %v1918, %v1721
        %v1923 = vmul.f32 %v1921, %v1721
        %v1924 = vsub.f32 %v1914, %v1922
        %v1925 = vsub.f32 %v1915, %v1923
        %v1926 = vmul.f32 %v1924, %v1924
        %v1927 = vmul.f32 %v1925, %v1925
        %v1928 = vsel %vm636, %v1926, 0.0
        %1929 = vadd.xlane.f32.xlu0 %v1928
        %v1930 = vpop.xlane.xlu0 %1929
        %v1931 = vsel %vm636, %v1927, 0.0
        %1932 = vadd.xlane.f32.xlu0 %v1931
        %v1933 = vpop.xlane.xlu0 %1932
        %v1934 = vmul.f32 %v1930, %v1721
        %v1935 = vmul.f32 %v1933, %v1721
        %v1936 = vadd.f32 %v1934, 1e-12
        %v1937 = vadd.f32 %v1935, 1e-12
        %v1938 = vrsqrt.pop %v1936
        %v1939 = vrsqrt.pop %v1937
        %v1940 = vmul.f32 %v1924, %v1938
        %v1941 = vmul.f32 %v1925, %v1939
        %v1942 = vlaneseq
        %v1943 = vshrl.u32 %v1942, 7
        %v1944 = vsub.s32 4, %v1943
        %v1945 = vrot.slane %v1648, %v1944
        %v1946 = vmul.f32 %v1940, %v1945
        %v1947 = vmul.f32 %v1941, %v1945
        %v1948 = vlaneseq
        %v1949 = vshrl.u32 %v1948, 7
        %v1950 = vsub.s32 5, %v1949
        %v1951 = vrot.slane %v1648, %v1950
        %v1952 = vadd.f32 %v1946, %v1951
        %v1953 = vadd.f32 %v1947, %v1951
        %1954 = vst.msk [vmem:[#allocation2] sm:$0xff] %vm636, %v1952
        %1955 = vst.msk [vmem:[#allocation2 + $0x8] sm:$0xff] %vm636, %v1953
        %p1956 = scmp.eq.s32.totalorder %s26, 1
        // Predicated region
        $region81: #{bert_sentiment_forward.1} parent=75 // pred_check
          %p1957 = pneg %p1956
        $region82: #{bert_sentiment_forward.1} parent=75 // pred_check_branch
          %1959 = sbr.rel (%p1957) target = $region84
        $region83: #{bert_sentiment_forward.1} parent=75 // pred_region
          %v1960 = vld [vmem:[#allocation2] ss:$8 sm:$0x3]
          %v1961 = vpack.c.bf16 %v1960, %v1960
          %v1962 = vld [vmem:[%s10] sm:$0xf]
          %v1963 = vld [vmem:[%s10 + $0x4] sm:$0xf]
          %v1964 = vld [vmem:[%s10 + $0x8] sm:$0xf]
          %v1965 = vld [vmem:[%s10 + $0xc] sm:$0xf]
          %v1966 = vld [vmem:[%s11] sm:$0x1]
          %v1968 = vlaneseq
          %v1969 = vshrl.u32 %v1968, 7
          %v1970 = vsub.s32 0, %v1969
          %v1971 = vrot.slane %v1966, %v1970
          %v1977 = vunpack.c.l.b16 %v1962
          %v1978 = vunpack.c.l.b16 %v1963
          %v1979 = vunpack.c.l.b16 %v1964
          %v1980 = vunpack.c.l.b16 %v1965
          %v1981 = vpack.c.b16 %v1978, %v1977
          %v1982 = vpack.c.b16 %v1980, %v1979
          %v1986 = vsel %vm636, %v1961, 0
          %1988 = vmatprep.subr.bf16.mxu0 0
          %1989 = vmatpush1.bf16.msra.mxu0 %v1981
          %1990 = vmatprep.subr.bf16.mxu0 0
          %1991 = vmatpush1.bf16.msra.mxu0 %v1982
          %1992 = vmatprep.subr.bf16.mxu0 0
          %1993 = vmatpush1.bf16.msra.mxu0 0
          %1994 = vmatprep.subr.bf16.mxu0 0
          %1995 = vmatpush1.bf16.msra.mxu0 0
          %1996 = vmatprep.subr.bf16.mxu0 0
          %1997 = vmatpush1.bf16.msra.mxu0 0
          %1998 = vmatprep.subr.bf16.mxu0 0
          %1999 = vmatpush1.bf16.msra.mxu0 0
          %2000 = vmatprep.subr.bf16.mxu0 0
          %2001 = vmatpush1.bf16.msra.mxu0 0
          %2002 = vmatprep.subr.bf16.mxu0 0
          %2003 = vmatpush1.bf16.msra.mxu0 0
          %2004 = vmatprep.subr.bf16.mxu0 0
          %2005 = vmatpush1.bf16.msra.mxu0 0
          %2006 = vmatprep.subr.bf16.mxu0 0
          %2007 = vmatpush1.bf16.msra.mxu0 0
          %2008 = vmatprep.subr.bf16.mxu0 0
          %2009 = vmatpush1.bf16.msra.mxu0 0
          %2010 = vmatprep.subr.bf16.mxu0 0
          %2011 = vmatpush1.bf16.msra.mxu0 0
          %2012 = vmatprep.subr.bf16.mxu0 0
          %2013 = vmatpush1.bf16.msra.mxu0 0
          %2014 = vmatprep.subr.bf16.mxu0 0
          %2015 = vmatpush1.bf16.msra.mxu0 0
          %2016 = vmatprep.subr.bf16.mxu0 0
          %2017 = vmatpush1.bf16.msra.mxu0 0
          %2018 = vmatprep.subr.bf16.mxu0 0
          %2019 = vmatpush1.bf16.msra.mxu0 0
          %2020 = vmatprep.mubr.bf16.mxu0 0
          %2021 = vmatmul.mubr.bf16.gmra.mrb[0].mxu0 %v1986
          %v2022 = vpop.f32.mrb[0].mxu0
          %v2023 = vadd.f32 %v1971, %v2022
          %v2024 = vpop.f32.mrb[0].mxu0
          %v2025 = vpop.f32.mrb[0].mxu0
          %v2026 = vpop.f32.mrb[0].mxu0
          %2027 = vdwg.mxu0
          %v2028 = vtanh.pop %v2023
          %v2029 = vpack.c.bf16 %v2028, %v2028
          %v2030 = vld [vmem:[%s12] sm:$0xf]
          %v2031 = vld [vmem:[%s12 + $0x4] sm:$0xf]
          %v2032 = vld [vmem:[%s12 + $0x8] sm:$0xf]
          %v2033 = vld [vmem:[%s12 + $0xc] sm:$0xf]
          %v2034 = vld [vmem:[%s13] sm:$0x1]
          %v2036 = vlaneseq
          %v2037 = vshrl.u32 %v2036, 7
          %v2038 = vsub.s32 0, %v2037
          %v2039 = vrot.slane %v2034, %v2038
          %v2045 = vunpack.c.l.b16 %v2030
          %v2046 = vunpack.c.l.b16 %v2031
          %v2047 = vunpack.c.l.b16 %v2032
          %v2048 = vunpack.c.l.b16 %v2033
          %v2049 = vpack.c.b16 %v2046, %v2045
          %v2050 = vpack.c.b16 %v2048, %v2047
          %v2054 = vsel %vm636, %v2029, 0
          %2056 = vmatprep.subr.bf16.mxu0 0
          %2057 = vmatpush1.bf16.msra.mxu0 %v2049
          %2058 = vmatprep.subr.bf16.mxu0 0
          %2059 = vmatpush1.bf16.msra.mxu0 %v2050
          %2060 = vmatprep.subr.bf16.mxu0 0
          %2061 = vmatpush1.bf16.msra.mxu0 0
          %2062 = vmatprep.subr.bf16.mxu0 0
          %2063 = vmatpush1.bf16.msra.mxu0 0
          %2064 = vmatprep.subr.bf16.mxu0 0
          %2065 = vmatpush1.bf16.msra.mxu0 0
          %2066 = vmatprep.subr.bf16.mxu0 0
          %2067 = vmatpush1.bf16.msra.mxu0 0
          %2068 = vmatprep.subr.bf16.mxu0 0
          %2069 = vmatpush1.bf16.msra.mxu0 0
          %2070 = vmatprep.subr.bf16.mxu0 0
          %2071 = vmatpush1.bf16.msra.mxu0 0
          %2072 = vmatprep.subr.bf16.mxu0 0
          %2073 = vmatpush1.bf16.msra.mxu0 0
          %2074 = vmatprep.subr.bf16.mxu0 0
          %2075 = vmatpush1.bf16.msra.mxu0 0
          %2076 = vmatprep.subr.bf16.mxu0 0
          %2077 = vmatpush1.bf16.msra.mxu0 0
          %2078 = vmatprep.subr.bf16.mxu0 0
          %2079 = vmatpush1.bf16.msra.mxu0 0
          %2080 = vmatprep.subr.bf16.mxu0 0
          %2081 = vmatpush1.bf16.msra.mxu0 0
          %2082 = vmatprep.subr.bf16.mxu0 0
          %2083 = vmatpush1.bf16.msra.mxu0 0
          %2084 = vmatprep.subr.bf16.mxu0 0
          %2085 = vmatpush1.bf16.msra.mxu0 0
          %2086 = vmatprep.subr.bf16.mxu0 0
          %2087 = vmatpush1.bf16.msra.mxu0 0
          %2088 = vmatprep.mubr.bf16.mxu0 0
          %2089 = vmatmul.mubr.bf16.gmra.mrb[0].mxu0 %v2054
          %v2090 = vpop.f32.mrb[0].mxu0
          %v2091 = vadd.f32 %v2039, %v2090
          %v2092 = vpop.f32.mrb[0].mxu0
          %v2093 = vpop.f32.mrb[0].mxu0
          %v2094 = vpop.f32.mrb[0].mxu0
          %2095 = vdwg.mxu0
          %2096 = vst [vmem:[#allocation3] sm:$0x3] %v2091
        $region84: #{bert_sentiment_forward.1} parent=75 // pred_fallthru
          _
        // Predicated region
        $region85: #{bert_sentiment_forward.1} parent=75 // pred_check
          %p2097 = pneg %p368
        $region86: #{bert_sentiment_forward.1} parent=75 // pred_check_branch
          %2099 = sbr.rel (%p2097) target = $region88
        $region87: #{bert_sentiment_forward.1} parent=75 // pred_region
          %s2101 = ssub.s32 32, 32
          %2102 = vsyncadd [#allocation4], %s2101
          %s2104 = sshll.u32 [#allocation3], 4
          %s2105 = int_to_ptr.vmem [resolvable:$true] %s2104
          %2107 = dma.vmem_to_hbm [thread:$0]  %s2105, 32, %s14, [#allocation4]
        $region88: #{bert_sentiment_forward.1} parent=75 // pred_fallthru
          _
        // Predicated region
        $region89: #{bert_sentiment_forward.1} parent=75 // pred_check
          %p2108 = pneg %p368
        $region90: #{bert_sentiment_forward.1} parent=75 // pred_check_branch
          %2110 = sbr.rel (%p2108) target = $region92
        $region91: #{bert_sentiment_forward.1} parent=75 // pred_region
          %2111 = dma.done [#allocation4], 32
        $region92: #{bert_sentiment_forward.1} parent=75 // pred_fallthru
          _
      $region76: #{bert_sentiment_forward.1} parent=5 // pred_fallthru
        _
      %p2112 = scmp.le.s32.totalorder 2, %s21
      // Predicated region
      $region93: #{bert_sentiment_forward.1} parent=5 // pred_check
        %p2113 = pneg %p2112
      $region94: #{bert_sentiment_forward.1} parent=5 // pred_check_branch
        %2115 = sbr.rel (%p2113) target = $region96
      $region95: #{bert_sentiment_forward.1} parent=5 // pred_region
        %s2116 = ssub.s32 %s21, 2
      $region96: #{bert_sentiment_forward.1} parent=5 // pred_fallthru
        _
    $region6: #{bert_sentiment_forward.1} parent=1 // loop_footer
      %s25 = sadd.s32 1, %s21
    $region7: #{bert_sentiment_forward.1} parent=1 // loop_footer_branch
      %20 = sbr.rel target = $region3
    $region8: #{bert_sentiment_forward.1} parent=1 // loop_exit
      _
    %2117 = vsyncpa [#allocation4], 1
    %s2118 = scalar_lea.sflag [#allocation4], 1
    %2119 = vsyncpa %s2118, 1

</llo_original>
